<compile_context>
chip_gen: v5e
topology: v5e:2x2
jax: 0.10.0
libtpu: 0.0.40
codegen_flags: <defaults>
</compile_context>

<pallas_src>
import functools
import math

import jax
import jax.numpy as jnp
from jax.experimental import pallas as pl
from jax.experimental.pallas import tpu as pltpu

EPS = 1e-15  # matches preprocess_r in CoarseGrainingVAE/conv.py


def _ceil8(x):
    return ((x + 7) // 8) * 8


# ----------------------------------------------------------------------------
# Fused kernel: all message layers (grid axis 0 = layer, "arbitrary") + heads
# ----------------------------------------------------------------------------
def prior_fused_kernel(h0_ref, dst_ref, src_ref, geo_ref, wl_ref, wh_ref,
                       out_ref, h_sc, v_sc, gj_sc, si_sc, vj_sc,
                       *, feat_dim, n_rbf):
    F = feat_dim
    R1 = n_rbf + 1
    layer = pl.program_id(0)
    n_layers = pl.num_programs(0)
    E, N = gj_sc.shape
    wd_row0 = _ceil8(F + 1)        # row where the (padded) distance-embed weight starts
    h2_row0 = _ceil8(F + 1)        # row where the head layer-2 weight starts

    # ---- one-time init at layer 0: accumulators + gather/scatter masks -------------
    # Masks are built in-kernel from the int32 neighbor list (no dense one-hots in HBM)
    # and stored as f32 so there are no per-layer casts.
    @pl.when(layer == 0)
    def _():
        h_sc[...] = h0_ref[...]
        v_sc[...] = jnp.zeros_like(v_sc)
        dst = dst_ref[...]                                            # (E, 1) int32  nbrs[:, 1]
        src = src_ref[...]                                            # (1, E) int32  nbrs[:, 0]
        gj_sc[...] = (jax.lax.broadcasted_iota(jnp.int32, (E, N), 1)
                      == dst).astype(jnp.float32)                     # (E, N) gather matrix
        si_sc[...] = (jax.lax.broadcasted_iota(jnp.int32, (N, E), 0)
                      == src).astype(jnp.float32)                     # (N, E) scatter_add matrix
        vj_sc[...] = jnp.zeros_like(vj_sc)                            # v == 0 -> skip gather

    # v_j gather only when v can be non-zero (saves one (E,N)@(N,3F) matmul on layer 0).
    @pl.when(layer > 0)
    def _():
        vj_sc[...] = jnp.dot(gj_sc[...], v_sc[...],
                             preferred_element_type=jnp.float32)      # (E, 3F)

    h = h_sc[...]                                                     # (N, F)
    gj = gj_sc[...]
    si = si_sc[...]
    geo = geo_ref[...]                                                # (E, 4F) [rbf_aug|0|unit_rep]
    unit_rep = geo[:, F:4 * F]                                        # (E, 3F)

    # Packed per-layer weights (single DMA): rows 0:F -> [W1 | W2], row F -> [B1 | B2],
    # rows wd_row0:wd_row0+4F, cols F:4F -> distance-embed weight zero-padded to 4F rows.
    W1 = wl_ref[0:F, 0:F]
    W2 = wl_ref[0:F, F:4 * F]
    B1 = wl_ref[F:F + 1, 0:F]
    B2 = wl_ref[F:F + 1, F:4 * F]
    WD = wl_ref[wd_row0:wd_row0 + 4 * F, F:4 * F]                     # (4F, 3F), rows >= R1 are 0

    # InvariantDense: Linear(F,F) -> swish -> Linear(F,3F)   (dropout=0 -> no-op)
    t = jnp.dot(h, W1, preferred_element_type=jnp.float32) + B1
    t = t * jax.nn.sigmoid(t)
    phi = jnp.dot(t, W2, preferred_element_type=jnp.float32) + B2     # (N, 3F)

    # Edge gather as one matmul; DistanceEmbed as one clean (E,128)@(128,3F) matmul
    # (envelope + bias already folded into geo's rbf_aug columns; extra rows are zero).
    phi_j = jnp.dot(gj, phi, preferred_element_type=jnp.float32)      # (E, 3F)
    w_s = jnp.dot(geo, WD, preferred_element_type=jnp.float32)        # (E, 3F)

    inv = phi_j * w_s                                                 # (E, 3F)
    s0 = inv[:, 0:F]          # gates v_j
    s1 = inv[:, F:2 * F]      # delta_s per edge
    s2 = inv[:, 2 * F:3 * F]  # gates unit vector

    # dv as ONE full-width FMA: [s2|s2|s2]*unit_rep + [s0|s0|s0]*v_j  (no per-axis loop)
    s2_rep = jnp.concatenate([s2, s2, s2], axis=-1)                   # (E, 3F)
    s0_rep = jnp.concatenate([s0, s0, s0], axis=-1)                   # (E, 3F)
    dv = s2_rep * unit_rep + s0_rep * vj_sc[...]                      # (E, 3F)

    comb = jnp.concatenate([s1, dv], axis=-1)                         # (E, 4F) lane-dense (=128)
    agg = jnp.dot(si, comb, preferred_element_type=jnp.float32)       # (N, 4F) scatter_add

    h_new = h + agg[:, 0:F]
    h_sc[...] = h_new
    v_sc[...] = v_sc[...] + agg[:, F:4 * F]

    # Heads fused into the last layer: h never round-trips through HBM.
    @pl.when(layer == n_layers - 1)
    def _():
        WH1 = wh_ref[0:F, :]                                          # (F, 2F)  [wm1 | ws1]
        BH1 = wh_ref[F:F + 1, :]
        WH2 = wh_ref[h2_row0:h2_row0 + 2 * F, :]                      # (2F, 2F) blockdiag(wm2, ws2)
        BH2 = wh_ref[h2_row0 + 2 * F:h2_row0 + 2 * F + 1, :]
        th = jnp.tanh(jnp.dot(h_new, WH1, preferred_element_type=jnp.float32) + BH1)
        o = jnp.dot(th, WH2, preferred_element_type=jnp.float32) + BH2   # (N, 2F) = [mu | logvar]
        mu = o[:, 0:F]
        std = 1e-9 + jnp.exp(o[:, F:2 * F] * 0.5)
        # lane-dense (N, 4F=128) store: [mu | std | zero pad]
        out_ref[...] = jnp.concatenate(
            [mu, std, jnp.zeros((mu.shape[0], 2 * F), jnp.float32)], axis=-1)


# ----------------------------------------------------------------------------
# Wrapper: graph glue + hoisted geometry + single pallas_call
# ----------------------------------------------------------------------------
def cgprior_forward(packed, cg_z, cg_xyz, nbr_undirected, *, cutoff, n_rbf):
    F = packed["embed"].shape[1]
    n_conv = packed["WL"].shape[0]
    R1 = n_rbf + 1
    N = cg_z.shape[0]
    WROWS = packed["WL"].shape[1]
    HROWS = packed["WH"].shape[0]
    assert R1 <= F, "rbf basis must fit in the first F columns of the geometry slab"

    # make_directed (glue): append flipped copies of the i<j rows.
    nbrs = jnp.concatenate([nbr_undirected, nbr_undirected[:, ::-1]], axis=0)
    E = nbrs.shape[0]

    h0 = packed["embed"][cg_z]                                        # (N, F) embedding gather
    r_ij = cg_xyz[nbrs[:, 1]] - cg_xyz[nbrs[:, 0]]                    # (E, 3)

    # ---- geometry hoisted out of the conv loop (computed once per forward) ----
    dist = jnp.sqrt(jnp.sum(r_ij * r_ij + EPS, axis=-1, keepdims=True))   # preprocess_r
    unit = r_ij / dist                                                     # (E, 3)
    n = jnp.arange(1, n_rbf + 1, dtype=jnp.float32)[None, :]
    inside = dist < cutoff
    rbf = jnp.where(inside, jnp.sin(n * (math.pi / cutoff) * dist) / dist, 0.0)   # (E, n_rbf)
    env = jnp.where(inside, 0.5 * (jnp.cos(math.pi / cutoff * dist) + 1.0), 0.0)  # (E, 1)
    # Envelope and the DistanceEmbed bias folded into one augmented basis:
    #   [env*rbf | env] @ [wd ; bd] == env * (rbf @ wd + bd)
    rbf_aug = jnp.concatenate([rbf * env, env], axis=-1)                            # (E, R1)
    unit_rep = jnp.repeat(unit, F, axis=-1)                                         # (E, 3F)
    # single lane-dense geometry slab (E, 4F): [rbf_aug | 0 pad | unit_rep]
    geo = jnp.concatenate(
        [rbf_aug, jnp.zeros((E, F - R1), jnp.float32), unit_rep], axis=-1
    ).astype(jnp.float32)

    # tiny int32 neighbor-index arrays (masks are built in-kernel; no dense one-hots)
    dst_col = nbrs[:, 1:2].astype(jnp.int32)                          # (E, 1) gather source
    src_row = nbrs[:, 0:1].T.astype(jnp.int32)                        # (1, E) scatter target

    kern = functools.partial(prior_fused_kernel, feat_dim=F, n_rbf=n_rbf)
    out = pl.pallas_call(
        kern,
        out_shape=jax.ShapeDtypeStruct((N, 4 * F), jnp.float32),
        grid_spec=pltpu.PrefetchScalarGridSpec(
            num_scalar_prefetch=0,
            grid=(n_conv,),
            in_specs=[
                # constant block index -> DMA'd once, stays VMEM-resident across layers
                pl.BlockSpec((N, F), lambda l: (0, 0)),                   # h0
                pl.BlockSpec((E, 1), lambda l: (0, 0)),                   # dst indices
                pl.BlockSpec((1, E), lambda l: (0, 0)),                   # src indices
                pl.BlockSpec((E, 4 * F), lambda l: (0, 0)),               # geometry slab
                # one packed per-layer weight slab, selected by the grid index
                pl.BlockSpec((None, WROWS, 4 * F), lambda l: (l, 0, 0)),  # [W1|W2|B1|B2|WD]
                # one packed head slab (read at the last layer only)
                pl.BlockSpec((HROWS, 2 * F), lambda l: (0, 0)),           # [WH1|BH1|WH2|BH2]
            ],
            out_specs=pl.BlockSpec((N, 4 * F), lambda l: (0, 0)),
            scratch_shapes=[
                pltpu.VMEM((N, F), jnp.float32),        # h accumulator
                pltpu.VMEM((N, 3 * F), jnp.float32),    # v accumulator [vx|vy|vz]
                pltpu.VMEM((E, N), jnp.float32),        # gather mask (built at layer 0)
                pltpu.VMEM((N, E), jnp.float32),        # scatter_add mask (built at layer 0)
                pltpu.VMEM((E, 3 * F), jnp.float32),    # v_j staging (skips gather at layer 0)
            ],
        ),
        compiler_params=pltpu.CompilerParams(dimension_semantics=("arbitrary",)),
    )(h0, dst_col, src_row, geo, packed["WL"], packed["WH"])

    return out[:, :F], out[:, F:2 * F]


# ----------------------------------------------------------------------------
# Weight packing (done once, outside the per-forward jit)
# ----------------------------------------------------------------------------
def pack_prior_params(params):
    F = params["embed"].shape[1]
    n_conv = params["W1"].shape[0]
    R1 = params["WD"].shape[1]                       # n_rbf + 1 (bias row folded in)

    wd_row0 = _ceil8(F + 1)
    WROWS = wd_row0 + 4 * F
    WL = jnp.zeros((n_conv, WROWS, 4 * F), jnp.float32)
    WL = WL.at[:, 0:F, 0:F].set(params["W1"])
    WL = WL.at[:, 0:F, F:4 * F].set(params["W2"])
    WL = WL.at[:, F, 0:F].set(params["B1"][:, 0, :])
    WL = WL.at[:, F, F:4 * F].set(params["B2"][:, 0, :])
    WL = WL.at[:, wd_row0:wd_row0 + R1, F:4 * F].set(params["WD"])   # rest of WD rows stay 0

    h2_row0 = _ceil8(F + 1)
    HROWS = _ceil8(h2_row0 + 2 * F + 1)
    WH = jnp.zeros((HROWS, 2 * F), jnp.float32)
    WH = WH.at[0:F, :].set(params["WH1"])
    WH = WH.at[F, :].set(params["BH1"][0])
    WH = WH.at[h2_row0:h2_row0 + 2 * F, :].set(params["WH2"])
    WH = WH.at[h2_row0 + 2 * F, :].set(params["BH2"][0])

    return dict(embed=params["embed"], WL=WL, WH=WH)


# ----------------------------------------------------------------------------
# Pure-JAX reference (mirrors the PyTorch per-layer math) for a correctness check
# ----------------------------------------------------------------------------
def cgprior_reference(params, cg_z, cg_xyz, nbr_undirected, *, cutoff):
    F = params["embed"].shape[1]
    n_conv = params["W1"].shape[0]
    n_rbf = params["WD"].shape[1] - 1
    N = cg_z.shape[0]

    nbrs = jnp.concatenate([nbr_undirected, nbr_undirected[:, ::-1]], axis=0)
    h = params["embed"][cg_z]
    v = jnp.zeros((N, 3 * F), jnp.float32)
    r = cg_xyz[nbrs[:, 1]] - cg_xyz[nbrs[:, 0]]
    dist = jnp.sqrt(jnp.sum(r * r + EPS, axis=-1, keepdims=True))
    unit = r / dist
    n = jnp.arange(1, n_rbf + 1, dtype=jnp.float32)[None, :]
    rbf = jnp.where(dist < cutoff, jnp.sin(n * (math.pi / cutoff) * dist) / dist, 0.0)
    env = jnp.where(dist < cutoff, 0.5 * (jnp.cos(math.pi / cutoff * dist) + 1.0), 0.0)

    for i in range(n_conv):
        wd, bd = params["WD"][i, :n_rbf], params["WD"][i, n_rbf:n_rbf + 1]
        t = h @ params["W1"][i] + params["B1"][i]
        t = t * jax.nn.sigmoid(t)
        phi = t @ params["W2"][i] + params["B2"][i]
        phi_j = phi[nbrs[:, 1]]
        w_s = (rbf @ wd + bd) * env
        inv = phi_j * w_s
        s0, s1, s2 = inv[:, :F], inv[:, F:2 * F], inv[:, 2 * F:]
        v_j = v[nbrs[:, 1]]
        dv = jnp.concatenate(
            [s2 * unit[:, a:a + 1] + s0 * v_j[:, a * F:(a + 1) * F] for a in range(3)], axis=-1)
        h = h + jnp.zeros((N, F), jnp.float32).at[nbrs[:, 0]].add(s1)
        v = v + jnp.zeros((N, 3 * F), jnp.float32).at[nbrs[:, 0]].add(dv)

    tm = jnp.tanh(h @ params["WH1"][:, :F] + params["BH1"][:, :F])
    mu = tm @ params["WH2"][:F, :F] + params["BH2"][:, :F]
    ts = jnp.tanh(h @ params["WH1"][:, F:] + params["BH1"][:, F:])
    sig = ts @ params["WH2"][F:, F:] + params["BH2"][:, F:]
    return mu, 1e-9 + jnp.exp(sig * 0.5)


# ----------------------------------------------------------------------------
# Deterministic parameter init (synthetic; no checkpoint)
# ----------------------------------------------------------------------------
def _dense(key, fan_in, fan_out):
    w = jax.random.normal(key, (fan_in, fan_out), jnp.float32) / math.sqrt(fan_in)
    b = jnp.zeros((1, fan_out), jnp.float32)
    return w, b


def init_params(key, feat_dim, n_rbf, n_conv):
    F = feat_dim
    keys = jax.random.split(key, 1 + 3 * n_conv + 4)
    ki = iter(keys)
    embed = jax.random.normal(next(ki), (100, F), jnp.float32) * 0.1
    embed = embed.at[0].set(0.0)                                  # padding_idx=0

    W1, B1, W2, B2, WD = [], [], [], [], []
    for _ in range(n_conv):
        w1, b1 = _dense(next(ki), F, F)
        w2, b2 = _dense(next(ki), F, 3 * F)
        wd, bd = _dense(next(ki), n_rbf, 3 * F)
        W1.append(w1); B1.append(b1)
        W2.append(w2); B2.append(b2)
        WD.append(jnp.concatenate([wd, bd], axis=0))              # fold bias as extra basis row

    # heads: mu / sigma MLPs fused column-wise (layer 1) and block-diagonally (layer 2)
    wm1, bm1 = _dense(next(ki), F, F)
    wm2, bm2 = _dense(next(ki), F, F)
    ws1, bs1 = _dense(next(ki), F, F)
    ws2, bs2 = _dense(next(ki), F, F)
    WH1 = jnp.concatenate([wm1, ws1], axis=1)                     # (F, 2F)
    BH1 = jnp.concatenate([bm1, bs1], axis=1)
    WH2 = jnp.zeros((2 * F, 2 * F), jnp.float32)
    WH2 = WH2.at[:F, :F].set(wm2).at[F:, F:].set(ws2)             # exact block-diagonal
    BH2 = jnp.concatenate([bm2, bs2], axis=1)

    return dict(embed=embed,
                W1=jnp.stack(W1), B1=jnp.stack(B1),
                W2=jnp.stack(W2), B2=jnp.stack(B2),
                WD=jnp.stack(WD),
                WH1=WH1, BH1=BH1, WH2=WH2, BH2=BH2)


if __name__ == "__main__":
    N, F, n_rbf, n_conv = 16, 32, 8, 2
    cutoff = 5.0

    key = jax.random.PRNGKey(0)
    k_z, k_xyz, k_p = jax.random.split(key, 3)

    cg_z = jax.random.randint(k_z, (N,), 1, 100, dtype=jnp.int32)          # CG bead types (>0)
    cg_xyz = jax.random.uniform(k_xyz, (N, 3), jnp.float32, 0.0, 4.0)       # coordinates

    # undirected neighbor list (i < j): chain + next-nearest
    und = []
    for i in range(N):
        for j in (i + 1, i + 2):
            if j < N:
                und.append((i, j))
    cg_nbr_list = jnp.array(und, dtype=jnp.int32)                           # (29, 2)

    params = init_params(k_p, F, n_rbf, n_conv)
    packed = pack_prior_params(params)                                      # packed once, outside jit

    fwd = jax.jit(functools.partial(cgprior_forward, cutoff=cutoff, n_rbf=n_rbf))
    H_mu, H_std = fwd(packed, cg_z, cg_xyz, cg_nbr_list)
    jax.block_until_ready((H_mu, H_std))

    ref_mu, ref_std = cgprior_reference(params, cg_z, cg_xyz, cg_nbr_list, cutoff=cutoff)

    assert H_mu.shape == (N, F) and H_std.shape == (N, F)
    assert bool(jnp.all(H_std > 0.0))
    assert bool(jnp.allclose(H_mu, ref_mu, rtol=1e-3, atol=1e-4))
    assert bool(jnp.allclose(H_std, ref_std, rtol=1e-3, atol=1e-4))
    print("KERNEL_OK")
</pallas_src>

<mosaic_0001>
module attributes {stable_mosaic.version = 11 : i64} {
  func.func @prior_fused_kernel(%arg0: i32, %arg1: memref<16x32xf32, #tpu.memory_space<vmem>>, %arg2: memref<58x1xi32, #tpu.memory_space<vmem>>, %arg3: memref<1x58xi32, #tpu.memory_space<vmem>>, %arg4: memref<58x128xf32, #tpu.memory_space<vmem>>, %arg5: memref<1x168x128xf32, #tpu.memory_space<vmem>>, %arg6: memref<112x64xf32, #tpu.memory_space<vmem>>, %arg7: memref<16x128xf32, #tpu.memory_space<vmem>>, %arg8: memref<16x32xf32, #tpu.memory_space<vmem>>, %arg9: memref<16x96xf32, #tpu.memory_space<vmem>>, %arg10: memref<58x16xf32, #tpu.memory_space<vmem>>, %arg11: memref<16x58xf32, #tpu.memory_space<vmem>>, %arg12: memref<58x96xf32, #tpu.memory_space<vmem>>) attributes {dimension_semantics = [#tpu.dimension_semantics<arbitrary>], iteration_bounds = array<i64: 2>, scalar_prefetch = 0 : i64, scratch_operands = 5 : i64, tpu.core_type = #tpu.core_type<tc>, window_params = [{pipeline_mode = #tpu.pipeline_mode<synchronous>, transform_indices = @transform_0, window_bounds = array<i64: 16, 32>}, {pipeline_mode = #tpu.pipeline_mode<synchronous>, transform_indices = @transform_1, window_bounds = array<i64: 58, 1>}, {pipeline_mode = #tpu.pipeline_mode<synchronous>, transform_indices = @transform_2, window_bounds = array<i64: 1, 58>}, {pipeline_mode = #tpu.pipeline_mode<synchronous>, transform_indices = @transform_3, window_bounds = array<i64: 58, 128>}, {transform_indices = @transform_4, window_bounds = array<i64: 1, 168, 128>}, {pipeline_mode = #tpu.pipeline_mode<synchronous>, transform_indices = @transform_5, window_bounds = array<i64: 112, 64>}, {pipeline_mode = #tpu.pipeline_mode<synchronous>, transform_indices = @transform_6, window_bounds = array<i64: 16, 128>}]} {
    %c0_i32 = arith.constant 0 : i32
    %0 = arith.cmpi eq, %arg0, %c0_i32 : i32
    %1 = arith.extui %0 : i1 to i32
    %c0_i32_0 = arith.constant 0 : i32
    %2 = arith.cmpi ne, %1, %c0_i32_0 : i32
    scf.if %2 {
      %c0_37 = arith.constant 0 : index
      %c0_38 = arith.constant 0 : index
      %57 = vector.load %arg1[%c0_37, %c0_38] : memref<16x32xf32, #tpu.memory_space<vmem>>, vector<16x32xf32>
      %c0_39 = arith.constant 0 : index
      %c0_40 = arith.constant 0 : index
      %58 = vector.load %arg8[%c0_39, %c0_40] : memref<16x32xf32, #tpu.memory_space<vmem>>, vector<16x32xf32>
      tpu.vector_store %arg8[%c0_39, %c0_40], %57 {strides = array<i32>} : memref<16x32xf32, #tpu.memory_space<vmem>>, vector<16x32xf32>,
      %cst_41 = arith.constant 0.000000e+00 : f32
      %59 = vector.broadcast %cst_41 : f32 to vector<16x96xf32>
      %c0_42 = arith.constant 0 : index
      %c0_43 = arith.constant 0 : index
      %60 = vector.load %arg9[%c0_42, %c0_43] : memref<16x96xf32, #tpu.memory_space<vmem>>, vector<16x96xf32>
      tpu.vector_store %arg9[%c0_42, %c0_43], %59 {strides = array<i32>} : memref<16x96xf32, #tpu.memory_space<vmem>>, vector<16x96xf32>,
      %c0_44 = arith.constant 0 : index
      %c0_45 = arith.constant 0 : index
      %61 = vector.load %arg2[%c0_44, %c0_45] : memref<58x1xi32, #tpu.memory_space<vmem>>, vector<58x1xi32>
      %c0_46 = arith.constant 0 : index
      %c0_47 = arith.constant 0 : index
      %62 = vector.load %arg3[%c0_46, %c0_47] : memref<1x58xi32, #tpu.memory_space<vmem>>, vector<1x58xi32>
      %63 = tpu.iota {dimensions = array<i32: 1>} : vector<58x16xi32>
      %64 = vector.broadcast %61 : vector<58x1xi32> to vector<58x16xi32>
      %65 = arith.cmpi eq, %63, %64 : vector<58x16xi32>
      %66 = arith.extui %65 : vector<58x16xi1> to vector<58x16xi32>
      %67 = arith.sitofp %66 : vector<58x16xi32> to vector<58x16xf32>
      %c0_48 = arith.constant 0 : index
      %c0_49 = arith.constant 0 : index
      %68 = vector.load %arg10[%c0_48, %c0_49] : memref<58x16xf32, #tpu.memory_space<vmem>>, vector<58x16xf32>
      tpu.vector_store %arg10[%c0_48, %c0_49], %67 {strides = array<i32>} : memref<58x16xf32, #tpu.memory_space<vmem>>, vector<58x16xf32>,
      %69 = tpu.iota {dimensions = array<i32: 0>} : vector<16x58xi32>
      %70 = vector.broadcast %62 : vector<1x58xi32> to vector<16x58xi32>
      %71 = arith.cmpi eq, %69, %70 : vector<16x58xi32>
      %72 = arith.extui %71 : vector<16x58xi1> to vector<16x58xi32>
      %73 = arith.sitofp %72 : vector<16x58xi32> to vector<16x58xf32>
      %c0_50 = arith.constant 0 : index
      %c0_51 = arith.constant 0 : index
      %74 = vector.load %arg11[%c0_50, %c0_51] : memref<16x58xf32, #tpu.memory_space<vmem>>, vector<16x58xf32>
      tpu.vector_store %arg11[%c0_50, %c0_51], %73 {strides = array<i32>} : memref<16x58xf32, #tpu.memory_space<vmem>>, vector<16x58xf32>,
      %cst_52 = arith.constant 0.000000e+00 : f32
      %75 = vector.broadcast %cst_52 : f32 to vector<58x96xf32>
      %c0_53 = arith.constant 0 : index
      %c0_54 = arith.constant 0 : index
      %76 = vector.load %arg12[%c0_53, %c0_54] : memref<58x96xf32, #tpu.memory_space<vmem>>, vector<58x96xf32>
      tpu.vector_store %arg12[%c0_53, %c0_54], %75 {strides = array<i32>} : memref<58x96xf32, #tpu.memory_space<vmem>>, vector<58x96xf32>,
    } else {
    }
    %c0_i32_1 = arith.constant 0 : i32
    %3 = arith.cmpi sgt, %arg0, %c0_i32_1 : i32
    %4 = arith.extui %3 : i1 to i32
    %c0_i32_2 = arith.constant 0 : i32
    %5 = arith.cmpi ne, %4, %c0_i32_2 : i32
    scf.if %5 {
      %c0_37 = arith.constant 0 : index
      %c0_38 = arith.constant 0 : index
      %57 = vector.load %arg10[%c0_37, %c0_38] : memref<58x16xf32, #tpu.memory_space<vmem>>, vector<58x16xf32>
      %c0_39 = arith.constant 0 : index
      %c0_40 = arith.constant 0 : index
      %58 = vector.load %arg9[%c0_39, %c0_40] : memref<16x96xf32, #tpu.memory_space<vmem>>, vector<16x96xf32>
      %cst_41 = arith.constant dense<0.000000e+00> : vector<58x96xf32>
      %59 = tpu.matmul %57, %58, %cst_41 {dimension_numbers = #tpu.dot_dimension_numbers<[1], [0], [0], [1], [0, 0, 1, 1], [], []>} : vector<58x16xf32>, vector<16x96xf32>, vector<58x96xf32> -> vector<58x96xf32>
      %c0_42 = arith.constant 0 : index
      %c0_43 = arith.constant 0 : index
      %60 = vector.load %arg12[%c0_42, %c0_43] : memref<58x96xf32, #tpu.memory_space<vmem>>, vector<58x96xf32>
      tpu.vector_store %arg12[%c0_42, %c0_43], %59 {strides = array<i32>} : memref<58x96xf32, #tpu.memory_space<vmem>>, vector<58x96xf32>,
    } else {
    }
    %c0 = arith.constant 0 : index
    %c0_3 = arith.constant 0 : index
    %6 = vector.load %arg8[%c0, %c0_3] : memref<16x32xf32, #tpu.memory_space<vmem>>, vector<16x32xf32>
    %c0_4 = arith.constant 0 : index
    %c0_5 = arith.constant 0 : index
    %7 = vector.load %arg10[%c0_4, %c0_5] : memref<58x16xf32, #tpu.memory_space<vmem>>, vector<58x16xf32>
    %c0_6 = arith.constant 0 : index
    %c0_7 = arith.constant 0 : index
    %8 = vector.load %arg11[%c0_6, %c0_7] : memref<16x58xf32, #tpu.memory_space<vmem>>, vector<16x58xf32>
    %c0_8 = arith.constant 0 : index
    %c0_9 = arith.constant 0 : index
    %9 = vector.load %arg4[%c0_8, %c0_9] : memref<58x128xf32, #tpu.memory_space<vmem>>, vector<58x128xf32>
    %10 = vector.extract_strided_slice %9 {offsets = [0, 32], sizes = [58, 96], strides = [1, 1]} : vector<58x128xf32> to vector<58x96xf32>
    %c0_10 = arith.constant 0 : index
    %c0_11 = arith.constant 0 : index
    %c0_12 = arith.constant 0 : index
    %11 = vector.load %arg5[%c0_10, %c0_11, %c0_12] : memref<1x168x128xf32, #tpu.memory_space<vmem>>, vector<1x32x32xf32>
    %12 = vector.shape_cast %11 : vector<1x32x32xf32> to vector<32x32xf32>
    %c0_13 = arith.constant 0 : index
    %c0_14 = arith.constant 0 : index
    %c32 = arith.constant 32 : index
    %13 = vector.load %arg5[%c0_13, %c0_14, %c32] : memref<1x168x128xf32, #tpu.memory_space<vmem>>, vector<1x32x96xf32>
    %14 = vector.shape_cast %13 : vector<1x32x96xf32> to vector<32x96xf32>
    %c0_15 = arith.constant 0 : index
    %c32_16 = arith.constant 32 : index
    %c0_17 = arith.constant 0 : index
    %15 = vector.load %arg5[%c0_15, %c32_16, %c0_17] : memref<1x168x128xf32, #tpu.memory_space<vmem>>, vector<1x1x32xf32>
    %16 = vector.shape_cast %15 : vector<1x1x32xf32> to vector<1x32xf32>
    %c0_18 = arith.constant 0 : index
    %c32_19 = arith.constant 32 : index
    %c32_20 = arith.constant 32 : index
    %17 = vector.load %arg5[%c0_18, %c32_19, %c32_20] : memref<1x168x128xf32, #tpu.memory_space<vmem>>, vector<1x1x96xf32>
    %18 = vector.shape_cast %17 : vector<1x1x96xf32> to vector<1x96xf32>
    %c0_21 = arith.constant 0 : index
    %c40 = arith.constant 40 : index
    %c32_22 = arith.constant 32 : index
    %19 = vector.load %arg5[%c0_21, %c40, %c32_22] : memref<1x168x128xf32, #tpu.memory_space<vmem>>, vector<1x128x96xf32>
    %20 = vector.shape_cast %19 : vector<1x128x96xf32> to vector<128x96xf32>
    %cst = arith.constant dense<0.000000e+00> : vector<16x32xf32>
    %21 = tpu.matmul %6, %12, %cst {dimension_numbers = #tpu.dot_dimension_numbers<[1], [0], [0], [1], [0, 0, 1, 1], [], []>} : vector<16x32xf32>, vector<32x32xf32>, vector<16x32xf32> -> vector<16x32xf32>
    %22 = vector.broadcast %16 : vector<1x32xf32> to vector<16x32xf32>
    %23 = arith.addf %21, %22 : vector<16x32xf32>
    %24 = arith.negf %23 : vector<16x32xf32>
    %25 = math.exp %24 : vector<16x32xf32>
    %cst_23 = arith.constant 1.000000e+00 : f32
    %26 = vector.broadcast %cst_23 : f32 to vector<16x32xf32>
    %27 = arith.addf %26, %25 : vector<16x32xf32>
    %28 = arith.divf %26, %27 : vector<16x32xf32>
    %29 = arith.mulf %23, %28 : vector<16x32xf32>
    %cst_24 = arith.constant dense<0.000000e+00> : vector<16x96xf32>
    %30 = tpu.matmul %29, %14, %cst_24 {dimension_numbers = #tpu.dot_dimension_numbers<[1], [0], [0], [1], [0, 0, 1, 1], [], []>} : vector<16x32xf32>, vector<32x96xf32>, vector<16x96xf32> -> vector<16x96xf32>
    %31 = vector.broadcast %18 : vector<1x96xf32> to vector<16x96xf32>
    %32 = arith.addf %30, %31 : vector<16x96xf32>
    %cst_25 = arith.constant dense<0.000000e+00> : vector<58x96xf32>
    %33 = tpu.matmul %7, %32, %cst_25 {dimension_numbers = #tpu.dot_dimension_numbers<[1], [0], [0], [1], [0, 0, 1, 1], [], []>} : vector<58x16xf32>, vector<16x96xf32>, vector<58x96xf32> -> vector<58x96xf32>
    %cst_26 = arith.constant dense<0.000000e+00> : vector<58x96xf32>
    %34 = tpu.matmul %9, %20, %cst_26 {dimension_numbers = #tpu.dot_dimension_numbers<[1], [0], [0], [1], [0, 0, 1, 1], [], []>} : vector<58x128xf32>, vector<128x96xf32>, vector<58x96xf32> -> vector<58x96xf32>
    %35 = arith.mulf %33, %34 : vector<58x96xf32>
    %36 = vector.extract_strided_slice %35 {offsets = [0, 0], sizes = [58, 32], strides = [1, 1]} : vector<58x96xf32> to vector<58x32xf32>
    %37 = vector.extract_strided_slice %35 {offsets = [0, 32], sizes = [58, 32], strides = [1, 1]} : vector<58x96xf32> to vector<58x32xf32>
    %38 = vector.extract_strided_slice %35 {offsets = [0, 64], sizes = [58, 32], strides = [1, 1]} : vector<58x96xf32> to vector<58x32xf32>
    %39 = tpu.concatenate %38, %38, %38 in 1 : vector<58x32xf32>, vector<58x32xf32>, vector<58x32xf32> -> vector<58x96xf32>
    %40 = tpu.concatenate %36, %36, %36 in 1 : vector<58x32xf32>, vector<58x32xf32>, vector<58x32xf32> -> vector<58x96xf32>
    %41 = arith.mulf %39, %10 : vector<58x96xf32>
    %c0_27 = arith.constant 0 : index
    %c0_28 = arith.constant 0 : index
    %42 = vector.load %arg12[%c0_27, %c0_28] : memref<58x96xf32, #tpu.memory_space<vmem>>, vector<58x96xf32>
    %43 = arith.mulf %40, %42 : vector<58x96xf32>
    %44 = arith.addf %41, %43 : vector<58x96xf32>
    %45 = tpu.concatenate %37, %44 in 1 : vector<58x32xf32>, vector<58x96xf32> -> vector<58x128xf32>
    %cst_29 = arith.constant dense<0.000000e+00> : vector<16x128xf32>
    %46 = tpu.matmul %8, %45, %cst_29 {dimension_numbers = #tpu.dot_dimension_numbers<[1], [0], [0], [1], [0, 0, 1, 1], [], []>} : vector<16x58xf32>, vector<58x128xf32>, vector<16x128xf32> -> vector<16x128xf32>
    %47 = vector.extract_strided_slice %46 {offsets = [0, 0], sizes = [16, 32], strides = [1, 1]} : vector<16x128xf32> to vector<16x32xf32>
    %48 = arith.addf %6, %47 : vector<16x32xf32>
    %c0_30 = arith.constant 0 : index
    %c0_31 = arith.constant 0 : index
    %49 = vector.load %arg8[%c0_30, %c0_31] : memref<16x32xf32, #tpu.memory_space<vmem>>, vector<16x32xf32>
    tpu.vector_store %arg8[%c0_30, %c0_31], %48 {strides = array<i32>} : memref<16x32xf32, #tpu.memory_space<vmem>>, vector<16x32xf32>,
    %c0_32 = arith.constant 0 : index
    %c0_33 = arith.constant 0 : index
    %50 = vector.load %arg9[%c0_32, %c0_33] : memref<16x96xf32, #tpu.memory_space<vmem>>, vector<16x96xf32>
    %51 = vector.extract_strided_slice %46 {offsets = [0, 32], sizes = [16, 96], strides = [1, 1]} : vector<16x128xf32> to vector<16x96xf32>
    %52 = arith.addf %50, %51 : vector<16x96xf32>
    %c0_34 = arith.constant 0 : index
    %c0_35 = arith.constant 0 : index
    %53 = vector.load %arg9[%c0_34, %c0_35] : memref<16x96xf32, #tpu.memory_space<vmem>>, vector<16x96xf32>
    tpu.vector_store %arg9[%c0_34, %c0_35], %52 {strides = array<i32>} : memref<16x96xf32, #tpu.memory_space<vmem>>, vector<16x96xf32>,
    %c1_i32 = arith.constant 1 : i32
    %54 = arith.cmpi eq, %arg0, %c1_i32 : i32
    %55 = arith.extui %54 : i1 to i32
    %c0_i32_36 = arith.constant 0 : i32
    %56 = arith.cmpi ne, %55, %c0_i32_36 : i32
    scf.if %56 {
      %c0_37 = arith.constant 0 : index
      %c0_38 = arith.constant 0 : index
      %57 = vector.load %arg6[%c0_37, %c0_38] : memref<112x64xf32, #tpu.memory_space<vmem>>, vector<32x64xf32>
      %c32_39 = arith.constant 32 : index
      %c0_40 = arith.constant 0 : index
      %58 = vector.load %arg6[%c32_39, %c0_40] : memref<112x64xf32, #tpu.memory_space<vmem>>, vector<1x64xf32>
      %c40_41 = arith.constant 40 : index
      %c0_42 = arith.constant 0 : index
      %59 = vector.load %arg6[%c40_41, %c0_42] : memref<112x64xf32, #tpu.memory_space<vmem>>, vector<64x64xf32>
      %c104 = arith.constant 104 : index
      %c0_43 = arith.constant 0 : index
      %60 = vector.load %arg6[%c104, %c0_43] : memref<112x64xf32, #tpu.memory_space<vmem>>, vector<1x64xf32>
      %cst_44 = arith.constant dense<0.000000e+00> : vector<16x64xf32>
      %61 = tpu.matmul %48, %57, %cst_44 {dimension_numbers = #tpu.dot_dimension_numbers<[1], [0], [0], [1], [0, 0, 1, 1], [], []>} : vector<16x32xf32>, vector<32x64xf32>, vector<16x64xf32> -> vector<16x64xf32>
      %62 = vector.broadcast %58 : vector<1x64xf32> to vector<16x64xf32>
      %63 = arith.addf %61, %62 : vector<16x64xf32>
      %64 = math.tanh %63 : vector<16x64xf32>
      %cst_45 = arith.constant dense<0.000000e+00> : vector<16x64xf32>
      %65 = tpu.matmul %64, %59, %cst_45 {dimension_numbers = #tpu.dot_dimension_numbers<[1], [0], [0], [1], [0, 0, 1, 1], [], []>} : vector<16x64xf32>, vector<64x64xf32>, vector<16x64xf32> -> vector<16x64xf32>
      %66 = vector.broadcast %60 : vector<1x64xf32> to vector<16x64xf32>
      %67 = arith.addf %65, %66 : vector<16x64xf32>
      %68 = vector.extract_strided_slice %67 {offsets = [0, 0], sizes = [16, 32], strides = [1, 1]} : vector<16x64xf32> to vector<16x32xf32>
      %69 = vector.extract_strided_slice %67 {offsets = [0, 32], sizes = [16, 32], strides = [1, 1]} : vector<16x64xf32> to vector<16x32xf32>
      %cst_46 = arith.constant 5.000000e-01 : f32
      %70 = vector.broadcast %cst_46 : f32 to vector<16x32xf32>
      %71 = arith.mulf %69, %70 : vector<16x32xf32>
      %72 = math.exp %71 : vector<16x32xf32>
      %cst_47 = arith.constant 9.99999971E-10 : f32
      %73 = vector.broadcast %cst_47 : f32 to vector<16x32xf32>
      %74 = arith.addf %73, %72 : vector<16x32xf32>
      %cst_48 = arith.constant 0.000000e+00 : f32
      %75 = vector.broadcast %cst_48 : f32 to vector<16x64xf32>
      %76 = tpu.concatenate %68, %74, %75 in 1 : vector<16x32xf32>, vector<16x32xf32>, vector<16x64xf32> -> vector<16x128xf32>
      %c0_49 = arith.constant 0 : index
      %c0_50 = arith.constant 0 : index
      %77 = vector.load %arg7[%c0_49, %c0_50] : memref<16x128xf32, #tpu.memory_space<vmem>>, vector<16x128xf32>
      tpu.vector_store %arg7[%c0_49, %c0_50], %76 {strides = array<i32>} : memref<16x128xf32, #tpu.memory_space<vmem>>, vector<16x128xf32>,
    } else {
    }
    return
  }
  func.func @transform_0(%arg0: i32) -> (i32, i32) {
    %c0_i32 = arith.constant 0 : i32
    %c0_i32_0 = arith.constant 0 : i32
    %c0_i32_1 = arith.constant 0 : i32
    return %c0_i32, %c0_i32_0 : i32, i32
  }
  func.func @transform_1(%arg0: i32) -> (i32, i32) {
    %c0_i32 = arith.constant 0 : i32
    %c0_i32_0 = arith.constant 0 : i32
    %c0_i32_1 = arith.constant 0 : i32
    return %c0_i32, %c0_i32_0 : i32, i32
  }
  func.func @transform_2(%arg0: i32) -> (i32, i32) {
    %c0_i32 = arith.constant 0 : i32
    %c0_i32_0 = arith.constant 0 : i32
    %c0_i32_1 = arith.constant 0 : i32
    return %c0_i32, %c0_i32_0 : i32, i32
  }
  func.func @transform_3(%arg0: i32) -> (i32, i32) {
    %c0_i32 = arith.constant 0 : i32
    %c0_i32_0 = arith.constant 0 : i32
    %c0_i32_1 = arith.constant 0 : i32
    return %c0_i32, %c0_i32_0 : i32, i32
  }
  func.func @transform_4(%arg0: i32) -> (i32, i32, i32) {
    %c0_i32 = arith.constant 0 : i32
    %c0_i32_0 = arith.constant 0 : i32
    %c0_i32_1 = arith.constant 0 : i32
    return %arg0, %c0_i32, %c0_i32_0 : i32, i32, i32
  }
  func.func @transform_5(%arg0: i32) -> (i32, i32) {
    %c0_i32 = arith.constant 0 : i32
    %c0_i32_0 = arith.constant 0 : i32
    %c0_i32_1 = arith.constant 0 : i32
    return %c0_i32, %c0_i32_0 : i32, i32
  }
  func.func @transform_6(%arg0: i32) -> (i32, i32) {
    %c0_i32 = arith.constant 0 : i32
    %c0_i32_0 = arith.constant 0 : i32
    %c0_i32_1 = arith.constant 0 : i32
    return %c0_i32, %c0_i32_0 : i32, i32
  }
}

</mosaic_0001>

<llo_original>
// kernel: cgprior_forward.1
$region0: #{cgprior_forward.1}
  #allocation0 [shape = 'u32[]', space=smem, size = 0x4, offset = 0x4, fixed_abs, tag = 'smem constant byte address 0x4 - core index']
  #allocation1 [shape = 'u32[72,128]{1,0:T(1,128)}', space=vmem, size = 0x9000, scoped, tag = 'internal scratch']
  #allocation2 [shape = 'f32[16,32]{1,0:T(8,128)}', space=vmem, size = 0x2000, scoped, tag = 'scratch operand']
  #allocation3 [shape = 'f32[16,96]{1,0:T(8,128)}', space=vmem, size = 0x2000, scoped, tag = 'scratch operand']
  #allocation4 [shape = 'f32[58,16]{1,0:T(8,128)}', space=vmem, size = 0x8000, scoped, tag = 'scratch operand']
  #allocation5 [shape = 'f32[16,58]{1,0:T(8,128)}', space=vmem, size = 0x2000, scoped, tag = 'scratch operand']
  #allocation6 [shape = 'f32[58,96]{1,0:T(8,128)}', space=vmem, size = 0x8000, scoped, tag = 'scratch operand']
  %s0 = inlined_call_operand.vmem [shape: f32[16,32], index: 0, kind: input, shape index: {}]
  %s1 = inlined_call_operand.vmem [shape: s32[58,1], index: 1, kind: input, shape index: {}]
  %s2 = inlined_call_operand.vmem [shape: s32[1,58], index: 2, kind: input, shape index: {}]
  %s3 = inlined_call_operand.vmem [shape: f32[58,128], index: 3, kind: input, shape index: {}]
  %s4 = inlined_call_operand.vmem [shape: f32[2,168,128], index: 4, kind: input, shape index: {}]
  %s5 = inlined_call_operand.vmem [shape: f32[112,64], index: 5, kind: input, shape index: {}]
  %s6 = inlined_call_operand.vmem [shape: f32[16,128], index: 6, kind: output, shape index: {}]
  %s7 = sld [smem:[#allocation0]]
  $region69: #{cgprior_forward.1} parent=0
    _
  %s9 = ssub.s32 1, %s7
  %s10 = scalar_select 0, %s9, %s7
  loop: start=0, step=1, limit=4
  $region2: #{cgprior_forward.1} parent=0 // loop_pre_header
    _
  $region3: #{cgprior_forward.1} parent=0 // loop_header
    %s12 = sphi 0, %s16
    %p13 = scmp.ge.s32.totalorder %s12, 4
    %s20 = sphi 0, %s20
    %s22 = sphi 0, %s20
    %s23 = sphi 0, %s22
    %s37 = sphi 0, %s23
    %s41 = sphi 0, %s41
    %s43 = sphi 0, %s41
    %s44 = sphi 0, %s43
    %s58 = sphi 0, %s44
    %s62 = sphi 0, %s62
    %s64 = sphi 0, %s62
    %s65 = sphi 0, %s64
    %s79 = sphi 0, %s65
    %s83 = sphi 0, %s83
    %s85 = sphi 0, %s83
    %s86 = sphi 0, %s85
    %s100 = sphi 0, %s86
    %s106 = sphi 0, %s108
    %s109 = sphi 0, %s106
    %s110 = sphi 0, %s109
    %s126 = sphi 0, %s110
    %s130 = sphi 0, %s130
    %s132 = sphi 0, %s130
    %s133 = sphi 0, %s132
    %s147 = sphi 0, %s133
    %s151 = sphi 0, %s151
    %s153 = sphi 0, %s151
    %s154 = sphi 0, %s153
    %s168 = sphi 0, %s154
  $region4: #{cgprior_forward.1} parent=0 // loop_header_branch
    %15 = sbr.rel (%p13) target = $region8
  $region5: #{cgprior_forward.1} parent=0 // loop_body
    %s17 = ssub.s32 %s12, 1
    %s18 = ssub.s32 %s12, 2
    %s19 = sadd.s32 %s12, 1
    %s21 = sadd.s32 %s20, 1
    %p24 = scmp.eq.s32.totalorder %s12, 1
    %p25 = scmp.ne.s32.totalorder %s20, %s22
    %p26 = scmp.eq.s32.totalorder %s12, 0
    %p27 = por %p25, %p26
    %p28 = scmp.ne.s32.totalorder %s20, %s22
    %p29 = scmp.eq.s32.totalorder %s17, 1
    %p30 = por %p28, %p29
    %p31 = scmp.ne.s32.totalorder %s22, %s23
    %p32 = scmp.eq.s32.totalorder %s17, 0
    %p33 = por %p31, %p32
    %p34 = scmp.ne.s32.totalorder %s22, %s23
    %p35 = scmp.eq.s32.totalorder %s18, 1
    %p36 = por %p34, %p35
    %p38 = scmp.ne.s32.totalorder %s23, %s37
    %p39 = scmp.eq.s32.totalorder %s18, 0
    %p40 = por %p38, %p39
    %s42 = sadd.s32 %s41, 1
    %p45 = scmp.eq.s32.totalorder %s12, 1
    %p46 = scmp.ne.s32.totalorder %s41, %s43
    %p47 = scmp.eq.s32.totalorder %s12, 0
    %p48 = por %p46, %p47
    %p49 = scmp.ne.s32.totalorder %s41, %s43
    %p50 = scmp.eq.s32.totalorder %s17, 1
    %p51 = por %p49, %p50
    %p52 = scmp.ne.s32.totalorder %s43, %s44
    %p53 = scmp.eq.s32.totalorder %s17, 0
    %p54 = por %p52, %p53
    %p55 = scmp.ne.s32.totalorder %s43, %s44
    %p56 = scmp.eq.s32.totalorder %s18, 1
    %p57 = por %p55, %p56
    %p59 = scmp.ne.s32.totalorder %s44, %s58
    %p60 = scmp.eq.s32.totalorder %s18, 0
    %p61 = por %p59, %p60
    %s63 = sadd.s32 %s62, 1
    %p66 = scmp.eq.s32.totalorder %s12, 1
    %p67 = scmp.ne.s32.totalorder %s62, %s64
    %p68 = scmp.eq.s32.totalorder %s12, 0
    %p69 = por %p67, %p68
    %p70 = scmp.ne.s32.totalorder %s62, %s64
    %p71 = scmp.eq.s32.totalorder %s17, 1
    %p72 = por %p70, %p71
    %p73 = scmp.ne.s32.totalorder %s64, %s65
    %p74 = scmp.eq.s32.totalorder %s17, 0
    %p75 = por %p73, %p74
    %p76 = scmp.ne.s32.totalorder %s64, %s65
    %p77 = scmp.eq.s32.totalorder %s18, 1
    %p78 = por %p76, %p77
    %p80 = scmp.ne.s32.totalorder %s65, %s79
    %p81 = scmp.eq.s32.totalorder %s18, 0
    %p82 = por %p80, %p81
    %s84 = sadd.s32 %s83, 1
    %p87 = scmp.eq.s32.totalorder %s12, 1
    %p88 = scmp.ne.s32.totalorder %s83, %s85
    %p89 = scmp.eq.s32.totalorder %s12, 0
    %p90 = por %p88, %p89
    %p91 = scmp.ne.s32.totalorder %s83, %s85
    %p92 = scmp.eq.s32.totalorder %s17, 1
    %p93 = por %p91, %p92
    %p94 = scmp.ne.s32.totalorder %s85, %s86
    %p95 = scmp.eq.s32.totalorder %s17, 0
    %p96 = por %p94, %p95
    %p97 = scmp.ne.s32.totalorder %s85, %s86
    %p98 = scmp.eq.s32.totalorder %s18, 1
    %p99 = por %p97, %p98
    %p101 = scmp.ne.s32.totalorder %s86, %s100
    %p102 = scmp.eq.s32.totalorder %s18, 0
    %p103 = por %p101, %p102
    %s104 = ssub.s32 %s12, %s19
    %p105 = scmp.eq.s32.totalorder %s104, 0
    %s107 = sadd.s32 %s106, 1
    %s108 = scalar_select %p105, %s106, %s107
    %p111 = pneg %p105
    %p112 = scmp.eq.s32.totalorder %s12, 1
    %p113 = por %p111, %p112
    %p114 = scmp.ne.s32.totalorder %s106, %s109
    %p115 = scmp.eq.s32.totalorder %s12, 0
    %p116 = por %p114, %p115
    %p117 = scmp.ne.s32.totalorder %s106, %s109
    %p118 = scmp.eq.s32.totalorder %s17, 1
    %p119 = por %p117, %p118
    %p120 = scmp.ne.s32.totalorder %s109, %s110
    %p121 = scmp.eq.s32.totalorder %s17, 0
    %p122 = por %p120, %p121
    %p123 = scmp.ne.s32.totalorder %s109, %s110
    %p124 = scmp.eq.s32.totalorder %s18, 1
    %p125 = por %p123, %p124
    %p127 = scmp.ne.s32.totalorder %s110, %s126
    %p128 = scmp.eq.s32.totalorder %s18, 0
    %p129 = por %p127, %p128
    %s131 = sadd.s32 %s130, 1
    %p134 = scmp.eq.s32.totalorder %s12, 1
    %p135 = scmp.ne.s32.totalorder %s130, %s132
    %p136 = scmp.eq.s32.totalorder %s12, 0
    %p137 = por %p135, %p136
    %p138 = scmp.ne.s32.totalorder %s130, %s132
    %p139 = scmp.eq.s32.totalorder %s17, 1
    %p140 = por %p138, %p139
    %p141 = scmp.ne.s32.totalorder %s132, %s133
    %p142 = scmp.eq.s32.totalorder %s17, 0
    %p143 = por %p141, %p142
    %p144 = scmp.ne.s32.totalorder %s132, %s133
    %p145 = scmp.eq.s32.totalorder %s18, 1
    %p146 = por %p144, %p145
    %p148 = scmp.ne.s32.totalorder %s133, %s147
    %p149 = scmp.eq.s32.totalorder %s18, 0
    %p150 = por %p148, %p149
    %s152 = sadd.s32 %s151, 1
    %p155 = scmp.eq.s32.totalorder %s12, 1
    %p156 = scmp.ne.s32.totalorder %s151, %s153
    %p157 = scmp.eq.s32.totalorder %s12, 0
    %p158 = por %p156, %p157
    %p159 = scmp.ne.s32.totalorder %s151, %s153
    %p160 = scmp.eq.s32.totalorder %s17, 1
    %p161 = por %p159, %p160
    %p162 = scmp.ne.s32.totalorder %s153, %s154
    %p163 = scmp.eq.s32.totalorder %s17, 0
    %p164 = por %p162, %p163
    %p165 = scmp.ne.s32.totalorder %s153, %s154
    %p166 = scmp.eq.s32.totalorder %s18, 1
    %p167 = por %p165, %p166
    %p169 = scmp.ne.s32.totalorder %s154, %s168
    %p170 = scmp.eq.s32.totalorder %s18, 0
    %p171 = por %p169, %p170
    %p172 = scmp.le.s32.totalorder 1, %s12
    %p173 = scmp.lt.s32.totalorder %s12, 3
    %p174 = pnand %p172, %p173
    %p175 = pneg %p174
    // Predicated region
    $region9: #{cgprior_forward.1} parent=5 // pred_check
      _
    $region10: #{cgprior_forward.1} parent=5 // pred_check_branch
      %177 = sbr.rel (%p174) target = $region12
    $region11: #{cgprior_forward.1} parent=5 // pred_region
      %s178 = ssub.s32 %s12, 1
      // Predicated region
      $region13: #{cgprior_forward.1} parent=11 // pred_check
        %p179 = pneg %p33
      $region14: #{cgprior_forward.1} parent=11 // pred_check_branch
        %181 = sbr.rel (%p179) target = $region16
      $region15: #{cgprior_forward.1} parent=11 // pred_region
        _
      $region16: #{cgprior_forward.1} parent=11 // pred_fallthru
        _
      // Predicated region
      $region17: #{cgprior_forward.1} parent=11 // pred_check
        %p182 = pneg %p54
      $region18: #{cgprior_forward.1} parent=11 // pred_check_branch
        %184 = sbr.rel (%p182) target = $region20
      $region19: #{cgprior_forward.1} parent=11 // pred_region
        _
      $region20: #{cgprior_forward.1} parent=11 // pred_fallthru
        _
      // Predicated region
      $region21: #{cgprior_forward.1} parent=11 // pred_check
        %p185 = pneg %p75
      $region22: #{cgprior_forward.1} parent=11 // pred_check_branch
        %187 = sbr.rel (%p185) target = $region24
      $region23: #{cgprior_forward.1} parent=11 // pred_region
        _
      $region24: #{cgprior_forward.1} parent=11 // pred_fallthru
        _
      // Predicated region
      $region25: #{cgprior_forward.1} parent=11 // pred_check
        %p188 = pneg %p96
      $region26: #{cgprior_forward.1} parent=11 // pred_check_branch
        %190 = sbr.rel (%p188) target = $region28
      $region27: #{cgprior_forward.1} parent=11 // pred_region
        _
      $region28: #{cgprior_forward.1} parent=11 // pred_fallthru
        _
      // Predicated region
      $region29: #{cgprior_forward.1} parent=11 // pred_check
        %p191 = pneg %p143
      $region30: #{cgprior_forward.1} parent=11 // pred_check_branch
        %193 = sbr.rel (%p191) target = $region32
      $region31: #{cgprior_forward.1} parent=11 // pred_region
        _
      $region32: #{cgprior_forward.1} parent=11 // pred_fallthru
        _
    $region12: #{cgprior_forward.1} parent=5 // pred_fallthru
      _
    %p194 = scmp.lt.s32.totalorder %s12, 2
    // Predicated region
    $region33: #{cgprior_forward.1} parent=5 // pred_check
      %p195 = pneg %p194
    $region34: #{cgprior_forward.1} parent=5 // pred_check_branch
      %197 = sbr.rel (%p195) target = $region36
    $region35: #{cgprior_forward.1} parent=5 // pred_region
      // Predicated region
      $region37: #{cgprior_forward.1} parent=35 // pred_check
        %p198 = pneg %p116
      $region38: #{cgprior_forward.1} parent=35 // pred_check_branch
        %200 = sbr.rel (%p198) target = $region40
      $region39: #{cgprior_forward.1} parent=35 // pred_region
        %p201 = scmp.lt.s32.totalorder %s12, 1
        %s202 = scalar_select %p201, %s12, 1
        %s203 = smul.addr %s202, 21
        %s204 = smul.addr %s203, 8
        %s205 = scalar_lea.vmem %s4, %s204
      $region40: #{cgprior_forward.1} parent=35 // pred_fallthru
        _
    $region36: #{cgprior_forward.1} parent=5 // pred_fallthru
      _
    %p206 = scmp.le.s32.totalorder 1, %s12
    %p207 = scmp.lt.s32.totalorder %s12, 3
    %p208 = pnand %p206, %p207
    %p209 = pneg %p208
    // Predicated region
    $region41: #{cgprior_forward.1} parent=5 // pred_check
      _
    $region42: #{cgprior_forward.1} parent=5 // pred_check_branch
      %211 = sbr.rel (%p208) target = $region44
    $region43: #{cgprior_forward.1} parent=5 // pred_region
      %s212 = ssub.s32 %s12, 1
      %p213 = pneg %p33
      %p214 = pneg %p30
      %p215 = pneg %p54
      %p216 = pneg %p51
      %p217 = pneg %p75
      %p218 = pneg %p72
      %p219 = pneg %p96
      %p220 = pneg %p93
      %p221 = scmp.lt.s32.totalorder %s17, 1
      %s222 = scalar_select %p221, %s17, 1
      %s223 = smul.addr %s222, 21
      %s224 = smul.addr %s223, 8
      %s225 = scalar_lea.vmem %s4, %s224
      %p226 = pneg %p122
      %p227 = pneg %p119
      %p228 = pneg %p143
      %p229 = pneg %p140
      %p230 = pneg %p164
      %p231 = pneg %p161
      %p232 = scmp.lt.s32.totalorder %s17, 1
      %s233 = scalar_select %p232, %s17, 1
      %s234 = smul.addr %s233, 21
      %s235 = smul.addr %s234, 8
      %s236 = scalar_lea.vmem %s4, %s235
      %p237 = scmp.eq.s32.totalorder %s17, 0
      // Predicated region
      $region45: #{cgprior_forward.1} parent=43 // pred_check
        %p238 = pneg %p237
      $region46: #{cgprior_forward.1} parent=43 // pred_check_branch
        %240 = sbr.rel (%p238) target = $region48
      $region47: #{cgprior_forward.1} parent=43 // pred_region
        %v241 = vld [vmem:[%s0] sm:$0xff]
        %v242 = vld [vmem:[%s0 + $0x8] sm:$0xff]
        %vm243 = vcmask 261120
        %244 = vst.msk [vmem:[#allocation2] sm:$0xff] %vm243, %v241
        %245 = vst.msk [vmem:[#allocation2 + $0x8] sm:$0xff] %vm243, %v242
        %vm246 = vcmask 785408
        %247 = vst.msk [vmem:[#allocation3] sm:$0xff] %vm246, 0.0
        %248 = vst.msk [vmem:[#allocation3 + $0x8] sm:$0xff] %vm246, 0.0
        %v249 = vld [vmem:[%s1] sm:$0xff]
        %v250 = vld [vmem:[%s1 + $0x8] sm:$0xff]
        %v251 = vld [vmem:[%s1 + $0x10] sm:$0xff]
        %v252 = vld [vmem:[%s1 + $0x18] sm:$0xff]
        %v253 = vld [vmem:[%s1 + $0x20] sm:$0xff]
        %v254 = vld [vmem:[%s1 + $0x28] sm:$0xff]
        %v255 = vld [vmem:[%s1 + $0x30] sm:$0xff]
        %v256 = vld [vmem:[%s1 + $0x38] sm:$0x3]
        %v257 = vld [vmem:[%s2] sm:$0x1]
        %v258 = vlaneseq
        %v259 = vand.u32 %v258, 127
        %260 = vset.pattern.permute.xlu0 0
        %261 = vperm.xlu0 %260, %v249
        %v262 = vpop.permute.xlu0 %261
        %263 = vset.pattern.permute.xlu0 0
        %264 = vperm.xlu0 %263, %v250
        %v265 = vpop.permute.xlu0 %264
        %266 = vset.pattern.permute.xlu0 0
        %267 = vperm.xlu0 %266, %v251
        %v268 = vpop.permute.xlu0 %267
        %269 = vset.pattern.permute.xlu0 0
        %270 = vperm.xlu0 %269, %v252
        %v271 = vpop.permute.xlu0 %270
        %272 = vset.pattern.permute.xlu0 0
        %273 = vperm.xlu0 %272, %v253
        %v274 = vpop.permute.xlu0 %273
        %275 = vset.pattern.permute.xlu0 0
        %276 = vperm.xlu0 %275, %v254
        %v277 = vpop.permute.xlu0 %276
        %278 = vset.pattern.permute.xlu0 0
        %279 = vperm.xlu0 %278, %v255
        %v280 = vpop.permute.xlu0 %279
        %281 = vset.pattern.permute.xlu0 0
        %282 = vperm.xlu0 %281, %v256
        %v283 = vpop.permute.xlu0 %282
        %vm284 = vcmp.eq.s32.totalorder %v259, %v262
        %vm285 = vcmp.eq.s32.totalorder %v259, %v265
        %vm286 = vcmp.eq.s32.totalorder %v259, %v268
        %vm287 = vcmp.eq.s32.totalorder %v259, %v271
        %vm288 = vcmp.eq.s32.totalorder %v259, %v274
        %vm289 = vcmp.eq.s32.totalorder %v259, %v277
        %vm290 = vcmp.eq.s32.totalorder %v259, %v280
        %vm291 = vcmp.eq.s32.totalorder %v259, %v283
        %v292 = vsel %vm284, 1, 0
        %v293 = vsel %vm285, 1, 0
        %v294 = vsel %vm286, 1, 0
        %v295 = vsel %vm287, 1, 0
        %v296 = vsel %vm288, 1, 0
        %v297 = vsel %vm289, 1, 0
        %v298 = vsel %vm290, 1, 0
        %v299 = vsel %vm291, 1, 0
        %v300 = vcvt.s32.f32 %v292
        %v301 = vcvt.s32.f32 %v293
        %v302 = vcvt.s32.f32 %v294
        %v303 = vcvt.s32.f32 %v295
        %v304 = vcvt.s32.f32 %v296
        %v305 = vcvt.s32.f32 %v297
        %v306 = vcvt.s32.f32 %v298
        %v307 = vcvt.s32.f32 %v299
        %vm308 = vcmask 130048
        %309 = vst.msk [vmem:[#allocation4] sm:$0xff] %vm308, %v300
        %310 = vst.msk [vmem:[#allocation4 + $0x8] sm:$0xff] %vm308, %v301
        %311 = vst.msk [vmem:[#allocation4 + $0x10] sm:$0xff] %vm308, %v302
        %312 = vst.msk [vmem:[#allocation4 + $0x18] sm:$0xff] %vm308, %v303
        %313 = vst.msk [vmem:[#allocation4 + $0x20] sm:$0xff] %vm308, %v304
        %314 = vst.msk [vmem:[#allocation4 + $0x28] sm:$0xff] %vm308, %v305
        %315 = vst.msk [vmem:[#allocation4 + $0x30] sm:$0xff] %vm308, %v306
        %vm316 = vcmask 123904
        %317 = vst.msk [vmem:[#allocation4 + $0x38] sm:$0x3] %vm316, %v307
        %v318 = vlaneseq
        %v319 = vshrl.u32 %v318, 7
        %v320 = vadd.s32 %v319, 8
        %v321 = vperm.slane %v257, 0
        %vm322 = vcmp.eq.s32.totalorder %v319, %v321
        %vm323 = vcmp.eq.s32.totalorder %v320, %v321
        %v324 = vsel %vm322, 1, 0
        %v325 = vsel %vm323, 1, 0
        %v326 = vcvt.s32.f32 %v324
        %v327 = vcvt.s32.f32 %v325
        %vm328 = vcmask 474112
        %329 = vst.msk [vmem:[#allocation5] sm:$0xff] %vm328, %v326
        %330 = vst.msk [vmem:[#allocation5 + $0x8] sm:$0xff] %vm328, %v327
        %331 = vst.msk [vmem:[#allocation6] sm:$0xff] %vm246, 0.0
        %332 = vst.msk [vmem:[#allocation6 + $0x8] sm:$0xff] %vm246, 0.0
        %333 = vst.msk [vmem:[#allocation6 + $0x10] sm:$0xff] %vm246, 0.0
        %334 = vst.msk [vmem:[#allocation6 + $0x18] sm:$0xff] %vm246, 0.0
        %335 = vst.msk [vmem:[#allocation6 + $0x20] sm:$0xff] %vm246, 0.0
        %336 = vst.msk [vmem:[#allocation6 + $0x28] sm:$0xff] %vm246, 0.0
        %337 = vst.msk [vmem:[#allocation6 + $0x30] sm:$0xff] %vm246, 0.0
        %vm338 = vcmask 779264
        %339 = vst.msk [vmem:[#allocation6 + $0x38] sm:$0x3] %vm338, 0.0
      $region48: #{cgprior_forward.1} parent=43 // pred_fallthru
        _
      %p340 = scmp.gt.s32.totalorder %s17, 0
      // Predicated region
      $region49: #{cgprior_forward.1} parent=43 // pred_check
        %p341 = pneg %p340
      $region50: #{cgprior_forward.1} parent=43 // pred_check_branch
        %343 = sbr.rel (%p341) target = $region52
      $region51: #{cgprior_forward.1} parent=43 // pred_region
        %v344 = vld [vmem:[#allocation4] sm:$0xff]
        %v345 = vld [vmem:[#allocation4 + $0x8] sm:$0xff]
        %v346 = vld [vmem:[#allocation4 + $0x10] sm:$0xff]
        %v347 = vld [vmem:[#allocation4 + $0x18] sm:$0xff]
        %v348 = vld [vmem:[#allocation4 + $0x20] sm:$0xff]
        %v349 = vld [vmem:[#allocation4 + $0x28] sm:$0xff]
        %v350 = vld [vmem:[#allocation4 + $0x30] sm:$0xff]
        %v351 = vld [vmem:[#allocation4 + $0x38] sm:$0x3]
        %v352 = vld [vmem:[#allocation3] sm:$0xff]
        %v353 = vld [vmem:[#allocation3 + $0x8] sm:$0xff]
        %vm354 = vcmask 130048
        %v356 = vsel %vm354, %v344, 0
        %v359 = vsel %vm354, %v345, 0
        %v362 = vsel %vm354, %v346, 0
        %v365 = vsel %vm354, %v347, 0
        %v368 = vsel %vm354, %v348, 0
        %v371 = vsel %vm354, %v349, 0
        %v374 = vsel %vm354, %v350, 0
        %v377 = vsel %vm354, %v351, 0
        %379 = vmatpush.msra.mxu0 0.0
        %380 = vmatpush.msra.mxu0 0.0
        %381 = vmatpush.msra.mxu0 0.0
        %382 = vmatpush.msra.mxu0 0.0
        %383 = vmatpush.msra.mxu0 0.0
        %384 = vmatpush.msra.mxu0 0.0
        %385 = vmatpush.msra.mxu0 0.0
        %386 = vmatpush.msra.mxu0 0.0
        %387 = vmatpush.msra.mxu0 0.0
        %388 = vmatpush.msra.mxu0 0.0
        %389 = vmatpush.msra.mxu0 0.0
        %390 = vmatpush.msra.mxu0 0.0
        %391 = vmatpush.msra.mxu0 0.0
        %392 = vmatpush.msra.mxu0 0.0
        %393 = vmatpush.msra.mxu0 %v353
        %394 = vmatpush.msra.mxu0 %v352
        %395 = vmatmul.f32.gmra.mxu0 %v356
        %v396 = vpop.f32.mrf.mxu0
        %v397 = vadd.f32 0.0, %v396
        %398 = vmatmul.f32.gmra.mxu0 %v359
        %v399 = vpop.f32.mrf.mxu0
        %v400 = vadd.f32 0.0, %v399
        %401 = vmatmul.f32.gmra.mxu0 %v362
        %v402 = vpop.f32.mrf.mxu0
        %v403 = vadd.f32 0.0, %v402
        %404 = vmatmul.f32.gmra.mxu0 %v365
        %v405 = vpop.f32.mrf.mxu0
        %v406 = vadd.f32 0.0, %v405
        %407 = vmatmul.f32.gmra.mxu0 %v368
        %v408 = vpop.f32.mrf.mxu0
        %v409 = vadd.f32 0.0, %v408
        %410 = vmatmul.f32.gmra.mxu0 %v371
        %v411 = vpop.f32.mrf.mxu0
        %v412 = vadd.f32 0.0, %v411
        %413 = vmatmul.f32.gmra.mxu0 %v374
        %v414 = vpop.f32.mrf.mxu0
        %v415 = vadd.f32 0.0, %v414
        %416 = vmatmul.f32.gmra.mxu0 %v377
        %v417 = vpop.f32.mrf.mxu0
        %v418 = vadd.f32 0.0, %v417
        %419 = vdwg.mxu0
        %vm420 = vcmask 785408
        %421 = vst.msk [vmem:[#allocation6] sm:$0xff] %vm420, %v397
        %422 = vst.msk [vmem:[#allocation6 + $0x8] sm:$0xff] %vm420, %v400
        %423 = vst.msk [vmem:[#allocation6 + $0x10] sm:$0xff] %vm420, %v403
        %424 = vst.msk [vmem:[#allocation6 + $0x18] sm:$0xff] %vm420, %v406
        %425 = vst.msk [vmem:[#allocation6 + $0x20] sm:$0xff] %vm420, %v409
        %426 = vst.msk [vmem:[#allocation6 + $0x28] sm:$0xff] %vm420, %v412
        %427 = vst.msk [vmem:[#allocation6 + $0x30] sm:$0xff] %vm420, %v415
        %vm428 = vcmask 779264
        %429 = vst.msk [vmem:[#allocation6 + $0x38] sm:$0x3] %vm428, %v418
      $region52: #{cgprior_forward.1} parent=43 // pred_fallthru
        _
      %v430 = vld [vmem:[#allocation2] sm:$0xff]
      %v431 = vld [vmem:[#allocation2 + $0x8] sm:$0xff]
      %v432 = vld [vmem:[#allocation4] sm:$0xff]
      %v433 = vld [vmem:[#allocation4 + $0x8] sm:$0xff]
      %v434 = vld [vmem:[#allocation4 + $0x10] sm:$0xff]
      %v435 = vld [vmem:[#allocation4 + $0x18] sm:$0xff]
      %v436 = vld [vmem:[#allocation4 + $0x20] sm:$0xff]
      %v437 = vld [vmem:[#allocation4 + $0x28] sm:$0xff]
      %v438 = vld [vmem:[#allocation4 + $0x30] sm:$0xff]
      %v439 = vld [vmem:[#allocation4 + $0x38] sm:$0x3]
      %v440 = vld [vmem:[#allocation5] sm:$0xff]
      %v441 = vld [vmem:[#allocation5 + $0x8] sm:$0xff]
      %v442 = vld [vmem:[%s3] sm:$0xff]
      %v443 = vld [vmem:[%s3 + $0x8] sm:$0xff]
      %v444 = vld [vmem:[%s3 + $0x10] sm:$0xff]
      %v445 = vld [vmem:[%s3 + $0x18] sm:$0xff]
      %v446 = vld [vmem:[%s3 + $0x20] sm:$0xff]
      %v447 = vld [vmem:[%s3 + $0x28] sm:$0xff]
      %v448 = vld [vmem:[%s3 + $0x30] sm:$0xff]
      %v449 = vld [vmem:[%s3 + $0x38] sm:$0x3]
      %v450 = vld [vmem:[%s236] sm:$0xff]
      %v451 = vld [vmem:[%s236 + $0x8] sm:$0xff]
      %v452 = vld [vmem:[%s236 + $0x10] sm:$0xff]
      %v453 = vld [vmem:[%s236 + $0x18] sm:$0xff]
      %v454 = vld [vmem:[%s236 + $0x20] sm:$0x1]
      %v455 = vld [vmem:[%s236 + $0x28] sm:$0xff]
      %v456 = vld [vmem:[%s236 + $0x30] sm:$0xff]
      %v457 = vld [vmem:[%s236 + $0x38] sm:$0xff]
      %v458 = vld [vmem:[%s236 + $0x40] sm:$0xff]
      %v459 = vld [vmem:[%s236 + $0x48] sm:$0xff]
      %v460 = vld [vmem:[%s236 + $0x50] sm:$0xff]
      %v461 = vld [vmem:[%s236 + $0x58] sm:$0xff]
      %v462 = vld [vmem:[%s236 + $0x60] sm:$0xff]
      %v463 = vld [vmem:[%s236 + $0x68] sm:$0xff]
      %v464 = vld [vmem:[%s236 + $0x70] sm:$0xff]
      %v465 = vld [vmem:[%s236 + $0x78] sm:$0xff]
      %v466 = vld [vmem:[%s236 + $0x80] sm:$0xff]
      %v467 = vld [vmem:[%s236 + $0x88] sm:$0xff]
      %v468 = vld [vmem:[%s236 + $0x90] sm:$0xff]
      %v469 = vld [vmem:[%s236 + $0x98] sm:$0xff]
      %v470 = vld [vmem:[%s236 + $0xa0] sm:$0xff]
      %v471 = vperm.slane %v454, 0
      %vm472 = vcmask 261120
      %v474 = vsel %vm472, %v430, 0
      %v477 = vsel %vm472, %v431, 0
      %479 = vmatpush.msra.mxu0 0.0
      %480 = vmatpush.msra.mxu0 0.0
      %481 = vmatpush.msra.mxu0 0.0
      %482 = vmatpush.msra.mxu0 0.0
      %483 = vmatpush.msra.mxu0 0.0
      %484 = vmatpush.msra.mxu0 0.0
      %485 = vmatpush.msra.mxu0 0.0
      %486 = vmatpush.msra.mxu0 0.0
      %487 = vmatpush.msra.mxu0 0.0
      %488 = vmatpush.msra.mxu0 0.0
      %489 = vmatpush.msra.mxu0 0.0
      %490 = vmatpush.msra.mxu0 0.0
      %491 = vmatpush.msra.mxu0 %v453
      %492 = vmatpush.msra.mxu0 %v452
      %493 = vmatpush.msra.mxu0 %v451
      %494 = vmatpush.msra.mxu0 %v450
      %495 = vmatmul.f32.gmra.mxu0 %v474
      %v496 = vpop.f32.mrf.mxu0
      %v497 = vadd.f32 %v471, %v496
      %498 = vmatmul.f32.gmra.mxu0 %v477
      %v499 = vpop.f32.mrf.mxu0
      %v500 = vadd.f32 %v471, %v499
      %501 = vdwg.mxu0
      %v502 = vxor.u32 %v497, 2147483648
      %v503 = vxor.u32 %v500, 2147483648
      %v504 = vmul.f32 %v502, 1.442695
      %v505 = vpow.pop %v504
      %v506 = vmul.f32 %v503, 1.442695
      %v507 = vpow.pop %v506
      %v508 = vadd.f32 %v505, 1.0
      %v509 = vadd.f32 %v507, 1.0
      %v510 = vrcp.pop %v508
      %v511 = vmul.f32 %v508, %v510
      %v512 = vsub.f32 1.0, %v511
      %v513 = vmul.f32 %v510, %v512
      %v514 = vadd.f32 %v510, %v513
      %vm515 = vweird.f32 %v508
      %vm516 = vweird.f32 %v510
      %vm517 = vmor %vm515, %vm516
      %v518 = vsel %vm517, %v510, %v514
      %v519 = vand.u32 2147483647, %v508
      %vm520 = vcmp.eq.f32.partialorder %v519, 8.507059e+37
      %v521 = vand.u32 %v508, 2147483648
      %v522 = vor.u32 1.1754944e-38, %v521
      %v523 = vsel %vm520, %v522, %v518
      %v524 = vmul.f32 1.0, %v523
      %v525 = vrcp.pop %v509
      %v526 = vmul.f32 %v509, %v525
      %v527 = vsub.f32 1.0, %v526
      %v528 = vmul.f32 %v525, %v527
      %v529 = vadd.f32 %v525, %v528
      %vm530 = vweird.f32 %v509
      %vm531 = vweird.f32 %v525
      %vm532 = vmor %vm530, %vm531
      %v533 = vsel %vm532, %v525, %v529
      %v534 = vand.u32 2147483647, %v509
      %vm535 = vcmp.eq.f32.partialorder %v534, 8.507059e+37
      %v536 = vand.u32 %v509, 2147483648
      %v537 = vor.u32 1.1754944e-38, %v536
      %v538 = vsel %vm535, %v537, %v533
      %v539 = vmul.f32 1.0, %v538
      %v540 = vmul.f32 %v497, %v524
      %v541 = vmul.f32 %v500, %v539
      %546 = vrot.lane.b32.xlu0 %v450, 96
      %v547 = vpop.permute.xlu0 %546
      %548 = vrot.lane.b32.xlu0 %v451, 96
      %v549 = vpop.permute.xlu0 %548
      %550 = vrot.lane.b32.xlu0 %v452, 96
      %v551 = vpop.permute.xlu0 %550
      %552 = vrot.lane.b32.xlu0 %v453, 96
      %v553 = vpop.permute.xlu0 %552
      %559 = vrot.lane.b32.xlu0 %v471, 96
      %v560 = vpop.permute.xlu0 %559
      %v563 = vsel %vm472, %v540, 0
      %v566 = vsel %vm472, %v541, 0
      %568 = vmatpush.msra.mxu0 0.0
      %569 = vmatpush.msra.mxu0 0.0
      %570 = vmatpush.msra.mxu0 0.0
      %571 = vmatpush.msra.mxu0 0.0
      %572 = vmatpush.msra.mxu0 0.0
      %573 = vmatpush.msra.mxu0 0.0
      %574 = vmatpush.msra.mxu0 0.0
      %575 = vmatpush.msra.mxu0 0.0
      %576 = vmatpush.msra.mxu0 0.0
      %577 = vmatpush.msra.mxu0 0.0
      %578 = vmatpush.msra.mxu0 0.0
      %579 = vmatpush.msra.mxu0 0.0
      %580 = vmatpush.msra.mxu0 %v553
      %581 = vmatpush.msra.mxu0 %v551
      %582 = vmatpush.msra.mxu0 %v549
      %583 = vmatpush.msra.mxu0 %v547
      %584 = vmatmul.f32.gmra.mxu0 %v563
      %v585 = vpop.f32.mrf.mxu0
      %v586 = vadd.f32 %v560, %v585
      %587 = vmatmul.f32.gmra.mxu0 %v566
      %v588 = vpop.f32.mrf.mxu0
      %v589 = vadd.f32 %v560, %v588
      %590 = vdwg.mxu0
      %vm591 = vcmask 130048
      %v593 = vsel %vm591, %v432, 0
      %v596 = vsel %vm591, %v433, 0
      %v599 = vsel %vm591, %v434, 0
      %v602 = vsel %vm591, %v435, 0
      %v605 = vsel %vm591, %v436, 0
      %v608 = vsel %vm591, %v437, 0
      %v611 = vsel %vm591, %v438, 0
      %v614 = vsel %vm591, %v439, 0
      %616 = vmatpush.msra.mxu0 0.0
      %617 = vmatpush.msra.mxu0 0.0
      %618 = vmatpush.msra.mxu0 0.0
      %619 = vmatpush.msra.mxu0 0.0
      %620 = vmatpush.msra.mxu0 0.0
      %621 = vmatpush.msra.mxu0 0.0
      %622 = vmatpush.msra.mxu0 0.0
      %623 = vmatpush.msra.mxu0 0.0
      %624 = vmatpush.msra.mxu0 0.0
      %625 = vmatpush.msra.mxu0 0.0
      %626 = vmatpush.msra.mxu0 0.0
      %627 = vmatpush.msra.mxu0 0.0
      %628 = vmatpush.msra.mxu0 0.0
      %629 = vmatpush.msra.mxu0 0.0
      %630 = vmatpush.msra.mxu0 %v589
      %631 = vmatpush.msra.mxu0 %v586
      %632 = vmatmul.f32.gmra.mxu0 %v593
      %v633 = vpop.f32.mrf.mxu0
      %v634 = vadd.f32 0.0, %v633
      %635 = vmatmul.f32.gmra.mxu0 %v596
      %v636 = vpop.f32.mrf.mxu0
      %v637 = vadd.f32 0.0, %v636
      %638 = vmatmul.f32.gmra.mxu0 %v599
      %v639 = vpop.f32.mrf.mxu0
      %v640 = vadd.f32 0.0, %v639
      %641 = vmatmul.f32.gmra.mxu0 %v602
      %v642 = vpop.f32.mrf.mxu0
      %v643 = vadd.f32 0.0, %v642
      %644 = vmatmul.f32.gmra.mxu0 %v605
      %v645 = vpop.f32.mrf.mxu0
      %v646 = vadd.f32 0.0, %v645
      %647 = vmatmul.f32.gmra.mxu0 %v608
      %v648 = vpop.f32.mrf.mxu0
      %v649 = vadd.f32 0.0, %v648
      %650 = vmatmul.f32.gmra.mxu0 %v611
      %v651 = vpop.f32.mrf.mxu0
      %v652 = vadd.f32 0.0, %v651
      %653 = vmatmul.f32.gmra.mxu0 %v614
      %v654 = vpop.f32.mrf.mxu0
      %v655 = vadd.f32 0.0, %v654
      %656 = vdwg.mxu0
      %673 = vrot.lane.b32.xlu0 %v455, 96
      %v674 = vpop.permute.xlu0 %673
      %675 = vrot.lane.b32.xlu0 %v456, 96
      %v676 = vpop.permute.xlu0 %675
      %677 = vrot.lane.b32.xlu0 %v457, 96
      %v678 = vpop.permute.xlu0 %677
      %679 = vrot.lane.b32.xlu0 %v458, 96
      %v680 = vpop.permute.xlu0 %679
      %681 = vrot.lane.b32.xlu0 %v459, 96
      %v682 = vpop.permute.xlu0 %681
      %683 = vrot.lane.b32.xlu0 %v460, 96
      %v684 = vpop.permute.xlu0 %683
      %685 = vrot.lane.b32.xlu0 %v461, 96
      %v686 = vpop.permute.xlu0 %685
      %687 = vrot.lane.b32.xlu0 %v462, 96
      %v688 = vpop.permute.xlu0 %687
      %689 = vrot.lane.b32.xlu0 %v463, 96
      %v690 = vpop.permute.xlu0 %689
      %691 = vrot.lane.b32.xlu0 %v464, 96
      %v692 = vpop.permute.xlu0 %691
      %693 = vrot.lane.b32.xlu0 %v465, 96
      %v694 = vpop.permute.xlu0 %693
      %695 = vrot.lane.b32.xlu0 %v466, 96
      %v696 = vpop.permute.xlu0 %695
      %697 = vrot.lane.b32.xlu0 %v467, 96
      %v698 = vpop.permute.xlu0 %697
      %699 = vrot.lane.b32.xlu0 %v468, 96
      %v700 = vpop.permute.xlu0 %699
      %701 = vrot.lane.b32.xlu0 %v469, 96
      %v702 = vpop.permute.xlu0 %701
      %703 = vrot.lane.b32.xlu0 %v470, 96
      %v704 = vpop.permute.xlu0 %703
      %721 = vmatpush.msra.mxu0 %v704
      %722 = vmatpush.msra.mxu0 %v702
      %723 = vmatpush.msra.mxu0 %v700
      %724 = vmatpush.msra.mxu0 %v698
      %725 = vmatpush.msra.mxu0 %v696
      %726 = vmatpush.msra.mxu0 %v694
      %727 = vmatpush.msra.mxu0 %v692
      %728 = vmatpush.msra.mxu0 %v690
      %729 = vmatpush.msra.mxu0 %v688
      %730 = vmatpush.msra.mxu0 %v686
      %731 = vmatpush.msra.mxu0 %v684
      %732 = vmatpush.msra.mxu0 %v682
      %733 = vmatpush.msra.mxu0 %v680
      %734 = vmatpush.msra.mxu0 %v678
      %735 = vmatpush.msra.mxu0 %v676
      %736 = vmatpush.msra.mxu0 %v674
      %737 = vmatmul.f32.gmra.mxu0 %v442
      %v738 = vpop.f32.mrf.mxu0
      %v739 = vadd.f32 0.0, %v738
      %740 = vmatmul.f32.gmra.mxu0 %v443
      %v741 = vpop.f32.mrf.mxu0
      %v742 = vadd.f32 0.0, %v741
      %743 = vmatmul.f32.gmra.mxu0 %v444
      %v744 = vpop.f32.mrf.mxu0
      %v745 = vadd.f32 0.0, %v744
      %746 = vmatmul.f32.gmra.mxu0 %v445
      %v747 = vpop.f32.mrf.mxu0
      %v748 = vadd.f32 0.0, %v747
      %749 = vmatmul.f32.gmra.mxu0 %v446
      %v750 = vpop.f32.mrf.mxu0
      %v751 = vadd.f32 0.0, %v750
      %752 = vmatmul.f32.gmra.mxu0 %v447
      %v753 = vpop.f32.mrf.mxu0
      %v754 = vadd.f32 0.0, %v753
      %755 = vmatmul.f32.gmra.mxu0 %v448
      %v756 = vpop.f32.mrf.mxu0
      %v757 = vadd.f32 0.0, %v756
      %758 = vmatmul.f32.gmra.mxu0 %v449
      %v759 = vpop.f32.mrf.mxu0
      %v760 = vadd.f32 0.0, %v759
      %761 = vdwg.mxu0
      %v762 = vmul.f32 %v634, %v739
      %v763 = vmul.f32 %v637, %v742
      %v764 = vmul.f32 %v640, %v745
      %v765 = vmul.f32 %v643, %v748
      %v766 = vmul.f32 %v646, %v751
      %v767 = vmul.f32 %v649, %v754
      %v768 = vmul.f32 %v652, %v757
      %v769 = vmul.f32 %v655, %v760
      %778 = vrot.lane.b32.xlu0 %v762, 64
      %v779 = vpop.permute.xlu0 %778
      %780 = vrot.lane.b32.xlu0 %v763, 64
      %v781 = vpop.permute.xlu0 %780
      %782 = vrot.lane.b32.xlu0 %v764, 64
      %v783 = vpop.permute.xlu0 %782
      %784 = vrot.lane.b32.xlu0 %v765, 64
      %v785 = vpop.permute.xlu0 %784
      %786 = vrot.lane.b32.xlu0 %v766, 64
      %v787 = vpop.permute.xlu0 %786
      %788 = vrot.lane.b32.xlu0 %v767, 64
      %v789 = vpop.permute.xlu0 %788
      %790 = vrot.lane.b32.xlu0 %v768, 64
      %v791 = vpop.permute.xlu0 %790
      %792 = vrot.lane.b32.xlu0 %v769, 64
      %v793 = vpop.permute.xlu0 %792
      %802 = vrot.lane.b32.xlu0 %v762, 96
      %v803 = vpop.permute.xlu0 %802
      %804 = vrot.lane.b32.xlu0 %v763, 96
      %v805 = vpop.permute.xlu0 %804
      %806 = vrot.lane.b32.xlu0 %v764, 96
      %v807 = vpop.permute.xlu0 %806
      %808 = vrot.lane.b32.xlu0 %v765, 96
      %v809 = vpop.permute.xlu0 %808
      %810 = vrot.lane.b32.xlu0 %v766, 96
      %v811 = vpop.permute.xlu0 %810
      %812 = vrot.lane.b32.xlu0 %v767, 96
      %v813 = vpop.permute.xlu0 %812
      %814 = vrot.lane.b32.xlu0 %v768, 96
      %v815 = vpop.permute.xlu0 %814
      %816 = vrot.lane.b32.xlu0 %v769, 96
      %v817 = vpop.permute.xlu0 %816
      %v826 = vsel %vm472, %v779, %v803
      %v827 = vsel %vm472, %v781, %v805
      %v828 = vsel %vm472, %v783, %v807
      %v829 = vsel %vm472, %v785, %v809
      %v830 = vsel %vm472, %v787, %v811
      %v831 = vsel %vm472, %v789, %v813
      %v832 = vsel %vm472, %v791, %v815
      %v833 = vsel %vm472, %v793, %v817
      %vm834 = vcmask 523264
      %v835 = vsel %vm834, %v826, %v762
      %v836 = vsel %vm834, %v827, %v763
      %v837 = vsel %vm834, %v828, %v764
      %v838 = vsel %vm834, %v829, %v765
      %v839 = vsel %vm834, %v830, %v766
      %v840 = vsel %vm834, %v831, %v767
      %v841 = vsel %vm834, %v832, %v768
      %v842 = vsel %vm834, %v833, %v769
      %843 = vrot.lane.b32.xlu0 %v762, 32
      %v844 = vpop.permute.xlu0 %843
      %845 = vrot.lane.b32.xlu0 %v763, 32
      %v846 = vpop.permute.xlu0 %845
      %847 = vrot.lane.b32.xlu0 %v764, 32
      %v848 = vpop.permute.xlu0 %847
      %849 = vrot.lane.b32.xlu0 %v765, 32
      %v850 = vpop.permute.xlu0 %849
      %851 = vrot.lane.b32.xlu0 %v766, 32
      %v852 = vpop.permute.xlu0 %851
      %853 = vrot.lane.b32.xlu0 %v767, 32
      %v854 = vpop.permute.xlu0 %853
      %855 = vrot.lane.b32.xlu0 %v768, 32
      %v856 = vpop.permute.xlu0 %855
      %857 = vrot.lane.b32.xlu0 %v769, 32
      %v858 = vpop.permute.xlu0 %857
      %v867 = vsel %vm472, %v762, %v844
      %v868 = vsel %vm472, %v763, %v846
      %v869 = vsel %vm472, %v764, %v848
      %v870 = vsel %vm472, %v765, %v850
      %v871 = vsel %vm472, %v766, %v852
      %v872 = vsel %vm472, %v767, %v854
      %v873 = vsel %vm472, %v768, %v856
      %v874 = vsel %vm472, %v769, %v858
      %v875 = vsel %vm834, %v867, %v779
      %v876 = vsel %vm834, %v868, %v781
      %v877 = vsel %vm834, %v869, %v783
      %v878 = vsel %vm834, %v870, %v785
      %v879 = vsel %vm834, %v871, %v787
      %v880 = vsel %vm834, %v872, %v789
      %v881 = vsel %vm834, %v873, %v791
      %v882 = vsel %vm834, %v874, %v793
      %891 = vrot.lane.b32.xlu0 %v442, 96
      %v892 = vpop.permute.xlu0 %891
      %893 = vrot.lane.b32.xlu0 %v443, 96
      %v894 = vpop.permute.xlu0 %893
      %895 = vrot.lane.b32.xlu0 %v444, 96
      %v896 = vpop.permute.xlu0 %895
      %897 = vrot.lane.b32.xlu0 %v445, 96
      %v898 = vpop.permute.xlu0 %897
      %899 = vrot.lane.b32.xlu0 %v446, 96
      %v900 = vpop.permute.xlu0 %899
      %901 = vrot.lane.b32.xlu0 %v447, 96
      %v902 = vpop.permute.xlu0 %901
      %903 = vrot.lane.b32.xlu0 %v448, 96
      %v904 = vpop.permute.xlu0 %903
      %905 = vrot.lane.b32.xlu0 %v449, 96
      %v906 = vpop.permute.xlu0 %905
      %v915 = vmul.f32 %v835, %v892
      %v916 = vmul.f32 %v836, %v894
      %v917 = vmul.f32 %v837, %v896
      %v918 = vmul.f32 %v838, %v898
      %v919 = vmul.f32 %v839, %v900
      %v920 = vmul.f32 %v840, %v902
      %v921 = vmul.f32 %v841, %v904
      %v922 = vmul.f32 %v842, %v906
      %v923 = vld [vmem:[#allocation6] sm:$0xff]
      %v924 = vld [vmem:[#allocation6 + $0x8] sm:$0xff]
      %v925 = vld [vmem:[#allocation6 + $0x10] sm:$0xff]
      %v926 = vld [vmem:[#allocation6 + $0x18] sm:$0xff]
      %v927 = vld [vmem:[#allocation6 + $0x20] sm:$0xff]
      %v928 = vld [vmem:[#allocation6 + $0x28] sm:$0xff]
      %v929 = vld [vmem:[#allocation6 + $0x30] sm:$0xff]
      %v930 = vld [vmem:[#allocation6 + $0x38] sm:$0x3]
      %v931 = vmul.f32 %v875, %v923
      %v932 = vmul.f32 %v876, %v924
      %v933 = vmul.f32 %v877, %v925
      %v934 = vmul.f32 %v878, %v926
      %v935 = vmul.f32 %v879, %v927
      %v936 = vmul.f32 %v880, %v928
      %v937 = vmul.f32 %v881, %v929
      %v938 = vmul.f32 %v882, %v930
      %v939 = vadd.f32 %v915, %v931
      %v940 = vadd.f32 %v916, %v932
      %v941 = vadd.f32 %v917, %v933
      %v942 = vadd.f32 %v918, %v934
      %v943 = vadd.f32 %v919, %v935
      %v944 = vadd.f32 %v920, %v936
      %v945 = vadd.f32 %v921, %v937
      %v946 = vadd.f32 %v922, %v938
      %955 = vrot.lane.b32.xlu0 %v939, 32
      %v956 = vpop.permute.xlu0 %955
      %957 = vrot.lane.b32.xlu0 %v940, 32
      %v958 = vpop.permute.xlu0 %957
      %959 = vrot.lane.b32.xlu0 %v941, 32
      %v960 = vpop.permute.xlu0 %959
      %961 = vrot.lane.b32.xlu0 %v942, 32
      %v962 = vpop.permute.xlu0 %961
      %963 = vrot.lane.b32.xlu0 %v943, 32
      %v964 = vpop.permute.xlu0 %963
      %965 = vrot.lane.b32.xlu0 %v944, 32
      %v966 = vpop.permute.xlu0 %965
      %967 = vrot.lane.b32.xlu0 %v945, 32
      %v968 = vpop.permute.xlu0 %967
      %969 = vrot.lane.b32.xlu0 %v946, 32
      %v970 = vpop.permute.xlu0 %969
      %v979 = vsel %vm472, %v803, %v956
      %v980 = vsel %vm472, %v805, %v958
      %v981 = vsel %vm472, %v807, %v960
      %v982 = vsel %vm472, %v809, %v962
      %v983 = vsel %vm472, %v811, %v964
      %v984 = vsel %vm472, %v813, %v966
      %v985 = vsel %vm472, %v815, %v968
      %v986 = vsel %vm472, %v817, %v970
      %vm987 = vcmask 474112
      %v989 = vsel %vm987, %v440, 0
      %v992 = vsel %vm987, %v441, 0
      %vm994 = vcmask 1041408
      %v996 = vsel %vm994, %v986, 0
      %998 = vmatpush.msra.mxu0 0.0
      %999 = vmatpush.msra.mxu0 0.0
      %1000 = vmatpush.msra.mxu0 0.0
      %1001 = vmatpush.msra.mxu0 0.0
      %1002 = vmatpush.msra.mxu0 0.0
      %1003 = vmatpush.msra.mxu0 0.0
      %1004 = vmatpush.msra.mxu0 0.0
      %1005 = vmatpush.msra.mxu0 0.0
      %1006 = vmatpush.msra.mxu0 %v996
      %1007 = vmatpush.msra.mxu0 %v985
      %1008 = vmatpush.msra.mxu0 %v984
      %1009 = vmatpush.msra.mxu0 %v983
      %1010 = vmatpush.msra.mxu0 %v982
      %1011 = vmatpush.msra.mxu0 %v981
      %1012 = vmatpush.msra.mxu0 %v980
      %1013 = vmatpush.msra.mxu0 %v979
      %1014 = vmatmul.f32.gmra.mxu0 %v989
      %v1015 = vpop.f32.mrf.mxu0
      %v1016 = vadd.f32 0.0, %v1015
      %1017 = vmatmul.f32.gmra.mxu0 %v992
      %v1018 = vpop.f32.mrf.mxu0
      %v1019 = vadd.f32 0.0, %v1018
      %1020 = vdwg.mxu0
      %v1021 = vadd.f32 %v430, %v1016
      %v1022 = vadd.f32 %v431, %v1019
      %1023 = vst.msk [vmem:[#allocation2] sm:$0xff] %vm472, %v1021
      %1024 = vst.msk [vmem:[#allocation2 + $0x8] sm:$0xff] %vm472, %v1022
      %v1025 = vld [vmem:[#allocation3] sm:$0xff]
      %v1026 = vld [vmem:[#allocation3 + $0x8] sm:$0xff]
      %1029 = vrot.lane.b32.xlu0 %v1016, 96
      %v1030 = vpop.permute.xlu0 %1029
      %1031 = vrot.lane.b32.xlu0 %v1019, 96
      %v1032 = vpop.permute.xlu0 %1031
      %v1035 = vadd.f32 %v1025, %v1030
      %v1036 = vadd.f32 %v1026, %v1032
      %vm1037 = vcmask 785408
      %1038 = vst.msk [vmem:[#allocation3] sm:$0xff] %vm1037, %v1035
      %1039 = vst.msk [vmem:[#allocation3 + $0x8] sm:$0xff] %vm1037, %v1036
      %p1040 = scmp.eq.s32.totalorder %s17, 1
      // Predicated region
      $region53: #{cgprior_forward.1} parent=43 // pred_check
        %p1041 = pneg %p1040
      $region54: #{cgprior_forward.1} parent=43 // pred_check_branch
        %1043 = sbr.rel (%p1041) target = $region56
      $region55: #{cgprior_forward.1} parent=43 // pred_region
        %v1044 = vld [vmem:[%s5] sm:$0xff]
        %v1045 = vld [vmem:[%s5 + $0x8] sm:$0xff]
        %v1046 = vld [vmem:[%s5 + $0x10] sm:$0xff]
        %v1047 = vld [vmem:[%s5 + $0x18] sm:$0xff]
        %v1048 = vld [vmem:[%s5 + $0x20] sm:$0x1]
        %v1049 = vld [vmem:[%s5 + $0x28] sm:$0xff]
        %v1050 = vld [vmem:[%s5 + $0x30] sm:$0xff]
        %v1051 = vld [vmem:[%s5 + $0x38] sm:$0xff]
        %v1052 = vld [vmem:[%s5 + $0x40] sm:$0xff]
        %v1053 = vld [vmem:[%s5 + $0x48] sm:$0xff]
        %v1054 = vld [vmem:[%s5 + $0x50] sm:$0xff]
        %v1055 = vld [vmem:[%s5 + $0x58] sm:$0xff]
        %v1056 = vld [vmem:[%s5 + $0x60] sm:$0xff]
        %v1057 = vld [vmem:[%s5 + $0x68] sm:$0x1]
        %v1058 = vperm.slane %v1048, 0
        %v1060 = vsel %vm472, %v1021, 0
        %v1063 = vsel %vm472, %v1022, 0
        %1065 = vmatpush.msra.mxu0 0.0
        %1066 = vmatpush.msra.mxu0 0.0
        %1067 = vmatpush.msra.mxu0 0.0
        %1068 = vmatpush.msra.mxu0 0.0
        %1069 = vmatpush.msra.mxu0 0.0
        %1070 = vmatpush.msra.mxu0 0.0
        %1071 = vmatpush.msra.mxu0 0.0
        %1072 = vmatpush.msra.mxu0 0.0
        %1073 = vmatpush.msra.mxu0 0.0
        %1074 = vmatpush.msra.mxu0 0.0
        %1075 = vmatpush.msra.mxu0 0.0
        %1076 = vmatpush.msra.mxu0 0.0
        %1077 = vmatpush.msra.mxu0 %v1047
        %1078 = vmatpush.msra.mxu0 %v1046
        %1079 = vmatpush.msra.mxu0 %v1045
        %1080 = vmatpush.msra.mxu0 %v1044
        %1081 = vmatmul.f32.gmra.mxu0 %v1060
        %v1082 = vpop.f32.mrf.mxu0
        %v1083 = vadd.f32 %v1058, %v1082
        %1084 = vmatmul.f32.gmra.mxu0 %v1063
        %v1085 = vpop.f32.mrf.mxu0
        %v1086 = vadd.f32 %v1058, %v1085
        %1087 = vdwg.mxu0
        %v1088 = vtanh.pop %v1083
        %v1089 = vtanh.pop %v1086
        %v1090 = vperm.slane %v1057, 0
        %v1092 = vsel %vm834, %v1088, 0
        %v1095 = vsel %vm834, %v1089, 0
        %1097 = vmatpush.msra.mxu0 0.0
        %1098 = vmatpush.msra.mxu0 0.0
        %1099 = vmatpush.msra.mxu0 0.0
        %1100 = vmatpush.msra.mxu0 0.0
        %1101 = vmatpush.msra.mxu0 0.0
        %1102 = vmatpush.msra.mxu0 0.0
        %1103 = vmatpush.msra.mxu0 0.0
        %1104 = vmatpush.msra.mxu0 0.0
        %1105 = vmatpush.msra.mxu0 %v1056
        %1106 = vmatpush.msra.mxu0 %v1055
        %1107 = vmatpush.msra.mxu0 %v1054
        %1108 = vmatpush.msra.mxu0 %v1053
        %1109 = vmatpush.msra.mxu0 %v1052
        %1110 = vmatpush.msra.mxu0 %v1051
        %1111 = vmatpush.msra.mxu0 %v1050
        %1112 = vmatpush.msra.mxu0 %v1049
        %1113 = vmatmul.f32.gmra.mxu0 %v1092
        %v1114 = vpop.f32.mrf.mxu0
        %v1115 = vadd.f32 %v1090, %v1114
        %1116 = vmatmul.f32.gmra.mxu0 %v1095
        %v1117 = vpop.f32.mrf.mxu0
        %v1118 = vadd.f32 %v1090, %v1117
        %1119 = vdwg.mxu0
        %v1120 = vmul.f32 %v1115, 0.5
        %v1121 = vmul.f32 %v1118, 0.5
        %v1122 = vmul.f32 %v1120, 1.442695
        %v1123 = vpow.pop %v1122
        %v1124 = vmul.f32 %v1121, 1.442695
        %v1125 = vpow.pop %v1124
        %v1126 = vadd.f32 %v1123, 1e-09
        %v1127 = vadd.f32 %v1125, 1e-09
        %v1128 = vsel %vm472, %v1115, %v1126
        %v1129 = vsel %vm472, %v1118, %v1127
        %v1130 = vsel %vm834, %v1128, 0.0
        %v1131 = vsel %vm834, %v1129, 0.0
        %1132 = vst [vmem:[%s6] sm:$0xff] %v1130
        %1133 = vst [vmem:[%s6 + $0x8] sm:$0xff] %v1131
      $region56: #{cgprior_forward.1} parent=43 // pred_fallthru
        _
      // Predicated region
      $region57: #{cgprior_forward.1} parent=43 // pred_check
        %p1134 = pneg %p161
      $region58: #{cgprior_forward.1} parent=43 // pred_check_branch
        %1136 = sbr.rel (%p1134) target = $region60
      $region59: #{cgprior_forward.1} parent=43 // pred_region
        _
      $region60: #{cgprior_forward.1} parent=43 // pred_fallthru
        _
      // Predicated region
      $region61: #{cgprior_forward.1} parent=43 // pred_check
        %p1137 = pneg %p161
      $region62: #{cgprior_forward.1} parent=43 // pred_check_branch
        %1139 = sbr.rel (%p1137) target = $region64
      $region63: #{cgprior_forward.1} parent=43 // pred_region
        _
      $region64: #{cgprior_forward.1} parent=43 // pred_fallthru
        _
    $region44: #{cgprior_forward.1} parent=5 // pred_fallthru
      _
    %p1140 = scmp.le.s32.totalorder 2, %s12
    // Predicated region
    $region65: #{cgprior_forward.1} parent=5 // pred_check
      %p1141 = pneg %p1140
    $region66: #{cgprior_forward.1} parent=5 // pred_check_branch
      %1143 = sbr.rel (%p1141) target = $region68
    $region67: #{cgprior_forward.1} parent=5 // pred_region
      %s1144 = ssub.s32 %s12, 2
    $region68: #{cgprior_forward.1} parent=5 // pred_fallthru
      _
  $region6: #{cgprior_forward.1} parent=0 // loop_footer
    %s16 = sadd.s32 1, %s12
  $region7: #{cgprior_forward.1} parent=0 // loop_footer_branch
    %11 = sbr.rel target = $region3
  $region8: #{cgprior_forward.1} parent=0 // loop_exit
    _

</llo_original>
